<compile_context>
chip_gen: v6e
topology: v6e:2x2x1
jax: 0.10.0
libtpu: 0.0.40
codegen_flags: <defaults>
</compile_context>

<pallas_src>
import jax
import jax.numpy as jnp
from jax.experimental import pallas as pl
from jax.experimental.pallas import tpu as pltpu


# ------------------------------ geometry ----------------------------------- #
B_BLK_MAX = 128           # max images per grid step (sweepable; keep a multiple of 8)
H0, W0 = 28, 28           # input spatial
C1, K1 = 6, 5             # conv1: 1 -> 6, 5x5
H1, W1 = 24, 24           # conv1 output spatial
P1 = 12                   # after 2x2 pool
C2, K2 = 16, 5            # conv2: 6 -> 16, 5x5
H2, W2 = 8, 8             # conv2 output spatial
P2 = 4                    # after 2x2 pool
L1 = W1 * C1              # 144 lanes, lane = x*6 + c    (conv1 output)
LP1 = P1 * C1             # 72  lanes, lane = q*6 + c    (pool1 output)
L2 = W2 * C2              # 128 lanes, lane = x2*16 + c2 (conv2 output)
LP2 = P2 * C2             # 64  lanes, lane = q2*16 + c2 (pool2 output)
NFC1, NFC2, NOUT = 120, 84, 10
LPAD = 128                # padded lane width for FC / logits


# ------------------------------ the kernel ---------------------------------- #
def _lenet_kernel(x_ref, m1_ref, b1_ref, sl1_ref, m2_ref, b2_ref, sl2_ref,
                  w3_ref, b3_ref, w4_ref, b4_ref, w5_ref, b5_ref, o_ref):
    f32, bf16 = jnp.float32, jnp.bfloat16
    B = x_ref.shape[1]                                        # batch rows this step

    def mm(act, w_ref):                                       # bf16 MXU op, f32 accum
        return jnp.dot(act.astype(bf16), w_ref[...], preferred_element_type=f32)

    # ---- conv1 + bias + ReLU: ONE banded matmul (5 taps concatenated along K) ----
    x = x_ref[...]                                            # [28, B, 28] (H, B, W) f32
    xcat = jnp.concatenate(
        [x[i:i + H1].reshape(H1 * B, W0) for i in range(K1)], axis=-1)   # [24B, 140]
    c1 = jnp.maximum(mm(xcat, m1_ref) + b1_ref[...], 0.0)     # [24B, 144] rows=(y,b) lanes=(x,c)

    # ---- 2x2 max-pool #1: sublane-half vertical max, lane-shift horizontal max,
    #      then a single stride-2 lane-downsample matmul (sr1 eliminated) ----
    c1v = c1.reshape(P1, 2 * B, L1)
    v1 = jnp.maximum(c1v[:, :B, :], c1v[:, B:, :]).reshape(P1 * B, L1)   # [12B, 144]
    h1 = jnp.maximum(v1[:, :L1 - C1], v1[:, C1:])             # [12B, 138]: max(x, x+1)
    p1 = mm(h1, sl1_ref)                                      # [12B, 72]  lanes=(q,ci)
    p1r = p1.reshape(P1, B, LP1)

    # ---- conv2 + bias + ReLU: ONE banded matmul (K = 5*72 = 360) ----
    zcat = jnp.concatenate(
        [p1r[i:i + H2].reshape(H2 * B, LP1) for i in range(K2)], axis=-1)   # [8B, 360]
    c2 = jnp.maximum(mm(zcat, m2_ref) + b2_ref[...], 0.0)     # [8B, 128] lanes=(x2,c2)

    # ---- 2x2 max-pool #2 (sr2 eliminated) ----
    c2v = c2.reshape(P2, 2 * B, L2)
    v2 = jnp.maximum(c2v[:, :B, :], c2v[:, B:, :]).reshape(P2 * B, L2)    # [4B, 128]
    h2 = jnp.maximum(v2[:, :L2 - C2], v2[:, C2:])             # [4B, 112]
    p2 = mm(h2, sl2_ref)                                      # [4B, 64]  lanes=(q2,c2)
    p2r = p2.reshape(P2, B, LP2)

    # ---- fc1 + ReLU: flatten by lane concat -> single K=256 dot (matches MXU depth) ----
    flat = jnp.concatenate([p2r[p] for p in range(P2)], axis=-1)          # [B, 256]
    a1 = jnp.maximum(mm(flat, w3_ref) + b3_ref[...], 0.0)     # [B, 128] (120 active)

    # ---- fc2 + ReLU, fc3 (lane-dense [B, 128] store; logits in lanes 0..9) ----
    a2 = jnp.maximum(mm(a1, w4_ref) + b4_ref[...], 0.0)
    o_ref[...] = mm(a2, w5_ref) + b5_ref[...]


# --------------------- trace-time operand preparation ----------------------- #
def _prepare_operands(params):
    """Fold conv kernels into pre-concatenated banded matrices (bf16), pool selections
    into single even-phase downsample matmuls (bf16), FC weights permuted/padded (bf16)."""
    f32, bf16 = jnp.float32, jnp.bfloat16
    w1 = params["conv1_w"].astype(f32)       # [6, 1, 5, 5]
    w2 = params["conv2_w"].astype(f32)       # [16, 6, 5, 5]

    # conv1 band, taps concatenated along K: m1[i*28 + w, x*6 + c] = w1[c, 0, i, w - x]
    d1 = (jnp.arange(W0)[None, :, None] - jnp.arange(W1)[None, None, :]
          == jnp.arange(K1)[:, None, None]).astype(f32)              # [5, 28, 24]
    m1 = jnp.einsum("jwx,cij->iwxc", d1, w1[:, 0]).reshape(K1 * W0, L1)   # [140, 144]

    # conv2 band: m2[i*72 + q*6 + ci, x2*16 + c2] = w2[c2, ci, i, q - x2]
    d2 = (jnp.arange(P1)[None, :, None] - jnp.arange(W2)[None, None, :]
          == jnp.arange(K2)[:, None, None]).astype(f32)              # [5, 12, 8]
    m2 = jnp.einsum("jqx,dcij->iqcxd", d2, w2).reshape(K2 * LP1, L2)      # [360, 128]

    b1l = jnp.tile(params["conv1_b"].astype(f32), W1).reshape(1, L1)
    b2l = jnp.tile(params["conv2_b"].astype(f32), W2).reshape(1, L2)

    # even-phase stride-2 lane-downsample selections (odd phase handled by in-kernel
    # lane-shift + max), rows trimmed to the shifted activation width.
    def sel(n_in, n_out, ch):
        e = (jnp.arange(n_in)[:, None] == 2 * jnp.arange(n_out)[None, :]).astype(f32)
        return jnp.kron(e, jnp.eye(ch, dtype=f32))
    sl1 = sel(W1, P1, C1)[: L1 - C1]          # [138, 72]
    sl2 = sel(W2, P2, C2)[: L2 - C2]          # [112, 64]

    # fc1 weight permuted to the kernel flatten order lane = p2*64 + q2*16 + c2, padded to 128
    w3 = params["fc1_w"].astype(f32).T.reshape(C2, P2, P2, NFC1)     # (c2, p2, q2, o)
    w3 = w3.transpose(1, 2, 0, 3).reshape(P2 * LP2, NFC1)            # [256, 120]
    w3 = jnp.pad(w3, ((0, 0), (0, LPAD - NFC1)))
    b3 = jnp.pad(params["fc1_b"].astype(f32), (0, LPAD - NFC1)).reshape(1, LPAD)

    w4 = jnp.pad(params["fc2_w"].astype(f32).T, ((0, LPAD - NFC1), (0, LPAD - NFC2)))
    b4 = jnp.pad(params["fc2_b"].astype(f32), (0, LPAD - NFC2)).reshape(1, LPAD)
    w5 = jnp.pad(params["fc3_w"].astype(f32).T, ((0, LPAD - NFC2), (0, LPAD - NOUT)))
    b5 = jnp.pad(params["fc3_b"].astype(f32), (0, LPAD - NOUT)).reshape(1, LPAD)

    return (m1.astype(bf16), b1l, sl1.astype(bf16),
            m2.astype(bf16), b2l, sl2.astype(bf16),
            w3.astype(bf16), b3, w4.astype(bf16), b4, w5.astype(bf16), b5)


def _full_spec(shape):
    zeros = (0,) * len(shape)
    return pl.BlockSpec(shape, lambda i: zeros)


def _pick_b_blk(n):
    """Largest power-of-two tile <= B_BLK_MAX, but keep >= 2 grid steps when the
    (8-rounded) batch allows it so v7x's second TensorCore isn't idle."""
    n8 = -(-n // 8) * 8
    if n8 < 16:
        return 8
    b = 8
    while b * 2 <= min(B_BLK_MAX, n8 // 2):
        b *= 2
    return b


# ------------------------------ forward pass -------------------------------- #
def garment_classifier_forward(params, x):
    """x: float32 NCHW [N, 1, 28, 28] -> logits [N, 10]."""
    N = x.shape[0]
    b_blk = _pick_b_blk(N)
    n_pad = -(-N // b_blk) * b_blk

    # (H, B, W) layout so conv row-slices are cheap leading-dim slices in the kernel.
    x_t = jnp.transpose(x[:, 0, :, :], (1, 0, 2)).astype(jnp.float32)   # [28, N, 28]
    if n_pad != N:
        x_t = jnp.pad(x_t, ((0, 0), (0, n_pad - N), (0, 0)))

    ops = _prepare_operands(params)

    out = pl.pallas_call(
        _lenet_kernel,
        out_shape=jax.ShapeDtypeStruct((n_pad, LPAD), jnp.float32),
        grid=(n_pad // b_blk,),
        in_specs=[
            pl.BlockSpec((H0, b_blk, W0), lambda i: (0, i, 0)),     # input batch tile
            _full_spec((K1 * W0, L1)),   _full_spec((1, L1)),       # conv1 band, bias
            _full_spec((L1 - C1, LP1)),                             # pool1 selection
            _full_spec((K2 * LP1, L2)),  _full_spec((1, L2)),       # conv2 band, bias
            _full_spec((L2 - C2, LP2)),                             # pool2 selection
            _full_spec((P2 * LP2, LPAD)), _full_spec((1, LPAD)),    # fc1 (K=256), bias
            _full_spec((LPAD, LPAD)),    _full_spec((1, LPAD)),     # fc2
            _full_spec((LPAD, LPAD)),    _full_spec((1, LPAD)),     # fc3
        ],
        out_specs=pl.BlockSpec((b_blk, LPAD), lambda i: (i, 0)),
        compiler_params=pltpu.CompilerParams(
            dimension_semantics=("parallel",),
            # peak live VMEM ~15 MiB at b_blk=128 (fits v5e/v6e/v7x); weights are
            # constant-index blocks so no pl.Buffered(1) needed at this size.
            vmem_limit_bytes=48 * 1024 * 1024),
    )(x_t, *ops)

    return out[:N, :NOUT]


# ----------------------- pure-JAX reference (for check) --------------------- #
def reference_forward(params, x):
    dn = ("NCHW", "OIHW", "NCHW")

    def conv(z, w, b):
        y = jax.lax.conv_general_dilated(z, w, (1, 1), "VALID", dimension_numbers=dn)
        return jnp.maximum(y + b[None, :, None, None], 0.0)

    def pool(z):
        return jax.lax.reduce_window(z, -jnp.inf, jax.lax.max,
                                     (1, 1, 2, 2), (1, 1, 2, 2), "VALID")

    y = pool(conv(x, params["conv1_w"], params["conv1_b"]))
    y = pool(conv(y, params["conv2_w"], params["conv2_b"]))
    flat = y.reshape(x.shape[0], 16 * 4 * 4)
    h1 = jnp.maximum(flat @ params["fc1_w"].T + params["fc1_b"], 0.0)
    h2 = jnp.maximum(h1 @ params["fc2_w"].T + params["fc2_b"], 0.0)
    return h2 @ params["fc3_w"].T + params["fc3_b"]


# ------------------------------- param init --------------------------------- #
def init_params(key):
    """Deterministic PyTorch-style uniform(-1/sqrt(fan_in), +1/sqrt(fan_in)) init."""
    def u(k, shape, fan_in):
        bound = 1.0 / jnp.sqrt(jnp.float32(fan_in))
        return jax.random.uniform(k, shape, jnp.float32, -bound, bound)

    ks = jax.random.split(key, 10)
    return {
        "conv1_w": u(ks[0], (6, 1, 5, 5), 1 * 5 * 5),
        "conv1_b": u(ks[1], (6,), 1 * 5 * 5),
        "conv2_w": u(ks[2], (16, 6, 5, 5), 6 * 5 * 5),
        "conv2_b": u(ks[3], (16,), 6 * 5 * 5),
        "fc1_w": u(ks[4], (120, 256), 256),
        "fc1_b": u(ks[5], (120,), 256),
        "fc2_w": u(ks[6], (84, 120), 120),
        "fc2_b": u(ks[7], (84,), 120),
        "fc3_w": u(ks[8], (10, 84), 84),
        "fc3_b": u(ks[9], (10,), 84),
    }


# ----------------------------------- main ------------------------------------ #
if __name__ == "__main__":
    key = jax.random.PRNGKey(0)
    pkey, xkey, xkey2 = jax.random.split(key, 3)
    params = init_params(pkey)

    fwd = jax.jit(garment_classifier_forward)
    ref_fwd = jax.jit(reference_forward)

    # 28x28 spatial is fixed by fc1's 16*4*4 input (LeNet geometry); small batch.
    x = jax.random.normal(xkey, (2, 1, 28, 28), dtype=jnp.float32)
    logits = jax.block_until_ready(fwd(params, x))
    assert logits.shape == (2, 10) and logits.dtype == jnp.float32
    ref = jax.block_until_ready(ref_fwd(params, x))
    # bf16 matmul operands (f32 accumulation) -> relaxed tolerance vs f32 reference.
    assert jnp.allclose(logits, ref, atol=1e-2, rtol=1e-2), "mismatch vs reference (N=2)"

    # Second, multi-tile batch exercises padding + grid > 1 (parallel across cores on v7x).
    x2 = jax.random.normal(xkey2, (20, 1, 28, 28), dtype=jnp.float32)
    logits2 = jax.block_until_ready(fwd(params, x2))
    ref2 = jax.block_until_ready(ref_fwd(params, x2))
    assert logits2.shape == (20, 10)
    assert jnp.allclose(logits2, ref2, atol=1e-2, rtol=1e-2), "mismatch vs reference (N=20)"

    print("KERNEL_OK")
</pallas_src>

<mosaic_0001>
module attributes {stable_mosaic.version = 11 : i64} {
  func.func @_lenet_kernel(%arg0: i32, %arg1: memref<28x8x28xf32, #tpu.memory_space<vmem>>, %arg2: memref<140x144xbf16, #tpu.memory_space<vmem>>, %arg3: memref<1x144xf32, #tpu.memory_space<vmem>>, %arg4: memref<138x72xbf16, #tpu.memory_space<vmem>>, %arg5: memref<360x128xbf16, #tpu.memory_space<vmem>>, %arg6: memref<1x128xf32, #tpu.memory_space<vmem>>, %arg7: memref<112x64xbf16, #tpu.memory_space<vmem>>, %arg8: memref<256x128xbf16, #tpu.memory_space<vmem>>, %arg9: memref<1x128xf32, #tpu.memory_space<vmem>>, %arg10: memref<128x128xbf16, #tpu.memory_space<vmem>>, %arg11: memref<1x128xf32, #tpu.memory_space<vmem>>, %arg12: memref<128x128xbf16, #tpu.memory_space<vmem>>, %arg13: memref<1x128xf32, #tpu.memory_space<vmem>>, %arg14: memref<8x128xf32, #tpu.memory_space<vmem>>) attributes {dimension_semantics = [#tpu.dimension_semantics<parallel>], iteration_bounds = array<i64: 1>, scalar_prefetch = 0 : i64, scratch_operands = 0 : i64, tpu.core_type = #tpu.core_type<tc>, window_params = [{transform_indices = @transform_0, window_bounds = array<i64: 28, 8, 28>}, {pipeline_mode = #tpu.pipeline_mode<synchronous>, transform_indices = @transform_1, window_bounds = array<i64: 140, 144>}, {pipeline_mode = #tpu.pipeline_mode<synchronous>, transform_indices = @transform_2, window_bounds = array<i64: 1, 144>}, {pipeline_mode = #tpu.pipeline_mode<synchronous>, transform_indices = @transform_3, window_bounds = array<i64: 138, 72>}, {pipeline_mode = #tpu.pipeline_mode<synchronous>, transform_indices = @transform_4, window_bounds = array<i64: 360, 128>}, {pipeline_mode = #tpu.pipeline_mode<synchronous>, transform_indices = @transform_5, window_bounds = array<i64: 1, 128>}, {pipeline_mode = #tpu.pipeline_mode<synchronous>, transform_indices = @transform_6, window_bounds = array<i64: 112, 64>}, {pipeline_mode = #tpu.pipeline_mode<synchronous>, transform_indices = @transform_7, window_bounds = array<i64: 256, 128>}, {pipeline_mode = #tpu.pipeline_mode<synchronous>, transform_indices = @transform_8, window_bounds = array<i64: 1, 128>}, {pipeline_mode = #tpu.pipeline_mode<synchronous>, transform_indices = @transform_9, window_bounds = array<i64: 128, 128>}, {pipeline_mode = #tpu.pipeline_mode<synchronous>, transform_indices = @transform_10, window_bounds = array<i64: 1, 128>}, {pipeline_mode = #tpu.pipeline_mode<synchronous>, transform_indices = @transform_11, window_bounds = array<i64: 128, 128>}, {pipeline_mode = #tpu.pipeline_mode<synchronous>, transform_indices = @transform_12, window_bounds = array<i64: 1, 128>}, {transform_indices = @transform_13, window_bounds = array<i64: 8, 128>}]} {
    %c0 = arith.constant 0 : index
    %c0_0 = arith.constant 0 : index
    %c0_1 = arith.constant 0 : index
    %0 = vector.load %arg1[%c0, %c0_0, %c0_1] : memref<28x8x28xf32, #tpu.memory_space<vmem>>, vector<28x8x28xf32>
    %1 = vector.extract_strided_slice %0 {offsets = [0, 0, 0], sizes = [24, 8, 28], strides = [1, 1, 1]} : vector<28x8x28xf32> to vector<24x8x28xf32>
    %2 = vector.shape_cast %1 : vector<24x8x28xf32> to vector<192x28xf32>
    %3 = vector.extract_strided_slice %0 {offsets = [1, 0, 0], sizes = [24, 8, 28], strides = [1, 1, 1]} : vector<28x8x28xf32> to vector<24x8x28xf32>
    %4 = vector.shape_cast %3 : vector<24x8x28xf32> to vector<192x28xf32>
    %5 = vector.extract_strided_slice %0 {offsets = [2, 0, 0], sizes = [24, 8, 28], strides = [1, 1, 1]} : vector<28x8x28xf32> to vector<24x8x28xf32>
    %6 = vector.shape_cast %5 : vector<24x8x28xf32> to vector<192x28xf32>
    %7 = vector.extract_strided_slice %0 {offsets = [3, 0, 0], sizes = [24, 8, 28], strides = [1, 1, 1]} : vector<28x8x28xf32> to vector<24x8x28xf32>
    %8 = vector.shape_cast %7 : vector<24x8x28xf32> to vector<192x28xf32>
    %9 = vector.extract_strided_slice %0 {offsets = [4, 0, 0], sizes = [24, 8, 28], strides = [1, 1, 1]} : vector<28x8x28xf32> to vector<24x8x28xf32>
    %10 = vector.shape_cast %9 : vector<24x8x28xf32> to vector<192x28xf32>
    %11 = tpu.concatenate %2, %4, %6, %8, %10 in 1 : vector<192x28xf32>, vector<192x28xf32>, vector<192x28xf32>, vector<192x28xf32>, vector<192x28xf32> -> vector<192x140xf32>
    %12 = arith.truncf %11 : vector<192x140xf32> to vector<192x140xbf16>
    %c0_2 = arith.constant 0 : index
    %c0_3 = arith.constant 0 : index
    %13 = vector.load %arg2[%c0_2, %c0_3] : memref<140x144xbf16, #tpu.memory_space<vmem>>, vector<140x144xbf16>
    %cst = arith.constant dense<0.000000e+00> : vector<192x144xf32>
    %14 = tpu.matmul %12, %13, %cst {dimension_numbers = #tpu.dot_dimension_numbers<[1], [0], [0], [1], [0, 0, 1, 1], [], []>} : vector<192x140xbf16>, vector<140x144xbf16>, vector<192x144xf32> -> vector<192x144xf32>
    %c0_4 = arith.constant 0 : index
    %c0_5 = arith.constant 0 : index
    %15 = vector.load %arg3[%c0_4, %c0_5] : memref<1x144xf32, #tpu.memory_space<vmem>>, vector<1x144xf32>
    %16 = vector.broadcast %15 : vector<1x144xf32> to vector<192x144xf32>
    %17 = arith.addf %14, %16 : vector<192x144xf32>
    %cst_6 = arith.constant 0.000000e+00 : f32
    %18 = vector.broadcast %cst_6 : f32 to vector<192x144xf32>
    %19 = arith.maximumf %17, %18 : vector<192x144xf32>
    %20 = vector.shape_cast %19 : vector<192x144xf32> to vector<12x16x144xf32>
    %21 = vector.extract_strided_slice %20 {offsets = [0, 0, 0], sizes = [12, 8, 144], strides = [1, 1, 1]} : vector<12x16x144xf32> to vector<12x8x144xf32>
    %22 = vector.extract_strided_slice %20 {offsets = [0, 8, 0], sizes = [12, 8, 144], strides = [1, 1, 1]} : vector<12x16x144xf32> to vector<12x8x144xf32>
    %23 = arith.maximumf %21, %22 : vector<12x8x144xf32>
    %24 = vector.shape_cast %23 : vector<12x8x144xf32> to vector<96x144xf32>
    %25 = vector.extract_strided_slice %24 {offsets = [0, 0], sizes = [96, 138], strides = [1, 1]} : vector<96x144xf32> to vector<96x138xf32>
    %26 = vector.extract_strided_slice %24 {offsets = [0, 6], sizes = [96, 138], strides = [1, 1]} : vector<96x144xf32> to vector<96x138xf32>
    %27 = arith.maximumf %25, %26 : vector<96x138xf32>
    %28 = arith.truncf %27 : vector<96x138xf32> to vector<96x138xbf16>
    %c0_7 = arith.constant 0 : index
    %c0_8 = arith.constant 0 : index
    %29 = vector.load %arg4[%c0_7, %c0_8] : memref<138x72xbf16, #tpu.memory_space<vmem>>, vector<138x72xbf16>
    %cst_9 = arith.constant dense<0.000000e+00> : vector<96x72xf32>
    %30 = tpu.matmul %28, %29, %cst_9 {dimension_numbers = #tpu.dot_dimension_numbers<[1], [0], [0], [1], [0, 0, 1, 1], [], []>} : vector<96x138xbf16>, vector<138x72xbf16>, vector<96x72xf32> -> vector<96x72xf32>
    %31 = vector.shape_cast %30 : vector<96x72xf32> to vector<12x8x72xf32>
    %32 = vector.extract_strided_slice %31 {offsets = [0, 0, 0], sizes = [8, 8, 72], strides = [1, 1, 1]} : vector<12x8x72xf32> to vector<8x8x72xf32>
    %33 = vector.shape_cast %32 : vector<8x8x72xf32> to vector<64x72xf32>
    %34 = vector.extract_strided_slice %31 {offsets = [1, 0, 0], sizes = [8, 8, 72], strides = [1, 1, 1]} : vector<12x8x72xf32> to vector<8x8x72xf32>
    %35 = vector.shape_cast %34 : vector<8x8x72xf32> to vector<64x72xf32>
    %36 = vector.extract_strided_slice %31 {offsets = [2, 0, 0], sizes = [8, 8, 72], strides = [1, 1, 1]} : vector<12x8x72xf32> to vector<8x8x72xf32>
    %37 = vector.shape_cast %36 : vector<8x8x72xf32> to vector<64x72xf32>
    %38 = vector.extract_strided_slice %31 {offsets = [3, 0, 0], sizes = [8, 8, 72], strides = [1, 1, 1]} : vector<12x8x72xf32> to vector<8x8x72xf32>
    %39 = vector.shape_cast %38 : vector<8x8x72xf32> to vector<64x72xf32>
    %40 = vector.extract_strided_slice %31 {offsets = [4, 0, 0], sizes = [8, 8, 72], strides = [1, 1, 1]} : vector<12x8x72xf32> to vector<8x8x72xf32>
    %41 = vector.shape_cast %40 : vector<8x8x72xf32> to vector<64x72xf32>
    %42 = tpu.concatenate %33, %35, %37, %39, %41 in 1 : vector<64x72xf32>, vector<64x72xf32>, vector<64x72xf32>, vector<64x72xf32>, vector<64x72xf32> -> vector<64x360xf32>
    %43 = arith.truncf %42 : vector<64x360xf32> to vector<64x360xbf16>
    %c0_10 = arith.constant 0 : index
    %c0_11 = arith.constant 0 : index
    %44 = vector.load %arg5[%c0_10, %c0_11] : memref<360x128xbf16, #tpu.memory_space<vmem>>, vector<360x128xbf16>
    %cst_12 = arith.constant dense<0.000000e+00> : vector<64x128xf32>
    %45 = tpu.matmul %43, %44, %cst_12 {dimension_numbers = #tpu.dot_dimension_numbers<[1], [0], [0], [1], [0, 0, 1, 1], [], []>} : vector<64x360xbf16>, vector<360x128xbf16>, vector<64x128xf32> -> vector<64x128xf32>
    %c0_13 = arith.constant 0 : index
    %c0_14 = arith.constant 0 : index
    %46 = vector.load %arg6[%c0_13, %c0_14] : memref<1x128xf32, #tpu.memory_space<vmem>>, vector<1x128xf32>
    %47 = vector.broadcast %46 : vector<1x128xf32> to vector<64x128xf32>
    %48 = arith.addf %45, %47 : vector<64x128xf32>
    %cst_15 = arith.constant 0.000000e+00 : f32
    %49 = vector.broadcast %cst_15 : f32 to vector<64x128xf32>
    %50 = arith.maximumf %48, %49 : vector<64x128xf32>
    %51 = vector.shape_cast %50 : vector<64x128xf32> to vector<4x16x128xf32>
    %52 = vector.extract_strided_slice %51 {offsets = [0, 0, 0], sizes = [4, 8, 128], strides = [1, 1, 1]} : vector<4x16x128xf32> to vector<4x8x128xf32>
    %53 = vector.extract_strided_slice %51 {offsets = [0, 8, 0], sizes = [4, 8, 128], strides = [1, 1, 1]} : vector<4x16x128xf32> to vector<4x8x128xf32>
    %54 = arith.maximumf %52, %53 : vector<4x8x128xf32>
    %55 = vector.shape_cast %54 : vector<4x8x128xf32> to vector<32x128xf32>
    %56 = vector.extract_strided_slice %55 {offsets = [0, 0], sizes = [32, 112], strides = [1, 1]} : vector<32x128xf32> to vector<32x112xf32>
    %57 = vector.extract_strided_slice %55 {offsets = [0, 16], sizes = [32, 112], strides = [1, 1]} : vector<32x128xf32> to vector<32x112xf32>
    %58 = arith.maximumf %56, %57 : vector<32x112xf32>
    %59 = arith.truncf %58 : vector<32x112xf32> to vector<32x112xbf16>
    %c0_16 = arith.constant 0 : index
    %c0_17 = arith.constant 0 : index
    %60 = vector.load %arg7[%c0_16, %c0_17] : memref<112x64xbf16, #tpu.memory_space<vmem>>, vector<112x64xbf16>
    %cst_18 = arith.constant dense<0.000000e+00> : vector<32x64xf32>
    %61 = tpu.matmul %59, %60, %cst_18 {dimension_numbers = #tpu.dot_dimension_numbers<[1], [0], [0], [1], [0, 0, 1, 1], [], []>} : vector<32x112xbf16>, vector<112x64xbf16>, vector<32x64xf32> -> vector<32x64xf32>
    %62 = vector.shape_cast %61 : vector<32x64xf32> to vector<4x8x64xf32>
    %63 = vector.extract_strided_slice %62 {offsets = [0, 0, 0], sizes = [1, 8, 64], strides = [1, 1, 1]} : vector<4x8x64xf32> to vector<1x8x64xf32>
    %64 = vector.shape_cast %63 : vector<1x8x64xf32> to vector<8x64xf32>
    %65 = vector.extract_strided_slice %62 {offsets = [1, 0, 0], sizes = [1, 8, 64], strides = [1, 1, 1]} : vector<4x8x64xf32> to vector<1x8x64xf32>
    %66 = vector.shape_cast %65 : vector<1x8x64xf32> to vector<8x64xf32>
    %67 = vector.extract_strided_slice %62 {offsets = [2, 0, 0], sizes = [1, 8, 64], strides = [1, 1, 1]} : vector<4x8x64xf32> to vector<1x8x64xf32>
    %68 = vector.shape_cast %67 : vector<1x8x64xf32> to vector<8x64xf32>
    %69 = vector.extract_strided_slice %62 {offsets = [3, 0, 0], sizes = [1, 8, 64], strides = [1, 1, 1]} : vector<4x8x64xf32> to vector<1x8x64xf32>
    %70 = vector.shape_cast %69 : vector<1x8x64xf32> to vector<8x64xf32>
    %71 = tpu.concatenate %64, %66, %68, %70 in 1 : vector<8x64xf32>, vector<8x64xf32>, vector<8x64xf32>, vector<8x64xf32> -> vector<8x256xf32>
    %72 = arith.truncf %71 : vector<8x256xf32> to vector<8x256xbf16>
    %c0_19 = arith.constant 0 : index
    %c0_20 = arith.constant 0 : index
    %73 = vector.load %arg8[%c0_19, %c0_20] : memref<256x128xbf16, #tpu.memory_space<vmem>>, vector<256x128xbf16>
    %cst_21 = arith.constant dense<0.000000e+00> : vector<8x128xf32>
    %74 = tpu.matmul %72, %73, %cst_21 {dimension_numbers = #tpu.dot_dimension_numbers<[1], [0], [0], [1], [0, 0, 1, 1], [], []>} : vector<8x256xbf16>, vector<256x128xbf16>, vector<8x128xf32> -> vector<8x128xf32>
    %c0_22 = arith.constant 0 : index
    %c0_23 = arith.constant 0 : index
    %75 = vector.load %arg9[%c0_22, %c0_23] : memref<1x128xf32, #tpu.memory_space<vmem>>, vector<1x128xf32>
    %76 = vector.broadcast %75 : vector<1x128xf32> to vector<8x128xf32>
    %77 = arith.addf %74, %76 : vector<8x128xf32>
    %cst_24 = arith.constant 0.000000e+00 : f32
    %78 = vector.broadcast %cst_24 : f32 to vector<8x128xf32>
    %79 = arith.maximumf %77, %78 : vector<8x128xf32>
    %80 = arith.truncf %79 : vector<8x128xf32> to vector<8x128xbf16>
    %c0_25 = arith.constant 0 : index
    %c0_26 = arith.constant 0 : index
    %81 = vector.load %arg10[%c0_25, %c0_26] : memref<128x128xbf16, #tpu.memory_space<vmem>>, vector<128x128xbf16>
    %cst_27 = arith.constant dense<0.000000e+00> : vector<8x128xf32>
    %82 = tpu.matmul %80, %81, %cst_27 {dimension_numbers = #tpu.dot_dimension_numbers<[1], [0], [0], [1], [0, 0, 1, 1], [], []>} : vector<8x128xbf16>, vector<128x128xbf16>, vector<8x128xf32> -> vector<8x128xf32>
    %c0_28 = arith.constant 0 : index
    %c0_29 = arith.constant 0 : index
    %83 = vector.load %arg11[%c0_28, %c0_29] : memref<1x128xf32, #tpu.memory_space<vmem>>, vector<1x128xf32>
    %84 = vector.broadcast %83 : vector<1x128xf32> to vector<8x128xf32>
    %85 = arith.addf %82, %84 : vector<8x128xf32>
    %cst_30 = arith.constant 0.000000e+00 : f32
    %86 = vector.broadcast %cst_30 : f32 to vector<8x128xf32>
    %87 = arith.maximumf %85, %86 : vector<8x128xf32>
    %88 = arith.truncf %87 : vector<8x128xf32> to vector<8x128xbf16>
    %c0_31 = arith.constant 0 : index
    %c0_32 = arith.constant 0 : index
    %89 = vector.load %arg12[%c0_31, %c0_32] : memref<128x128xbf16, #tpu.memory_space<vmem>>, vector<128x128xbf16>
    %cst_33 = arith.constant dense<0.000000e+00> : vector<8x128xf32>
    %90 = tpu.matmul %88, %89, %cst_33 {dimension_numbers = #tpu.dot_dimension_numbers<[1], [0], [0], [1], [0, 0, 1, 1], [], []>} : vector<8x128xbf16>, vector<128x128xbf16>, vector<8x128xf32> -> vector<8x128xf32>
    %c0_34 = arith.constant 0 : index
    %c0_35 = arith.constant 0 : index
    %91 = vector.load %arg13[%c0_34, %c0_35] : memref<1x128xf32, #tpu.memory_space<vmem>>, vector<1x128xf32>
    %92 = vector.broadcast %91 : vector<1x128xf32> to vector<8x128xf32>
    %93 = arith.addf %90, %92 : vector<8x128xf32>
    %c0_36 = arith.constant 0 : index
    %c0_37 = arith.constant 0 : index
    %94 = vector.load %arg14[%c0_36, %c0_37] : memref<8x128xf32, #tpu.memory_space<vmem>>, vector<8x128xf32>
    tpu.vector_store %arg14[%c0_36, %c0_37], %93 {strides = array<i32>} : memref<8x128xf32, #tpu.memory_space<vmem>>, vector<8x128xf32>,
    return
  }
  func.func @transform_0(%arg0: i32) -> (i32, i32, i32) {
    %c0_i32 = arith.constant 0 : i32
    %c0_i32_0 = arith.constant 0 : i32
    %c0_i32_1 = arith.constant 0 : i32
    return %c0_i32, %arg0, %c0_i32_0 : i32, i32, i32
  }
  func.func @transform_1(%arg0: i32) -> (i32, i32) {
    %c0_i32 = arith.constant 0 : i32
    %c0_i32_0 = arith.constant 0 : i32
    %c0_i32_1 = arith.constant 0 : i32
    return %c0_i32, %c0_i32_0 : i32, i32
  }
  func.func @transform_2(%arg0: i32) -> (i32, i32) {
    %c0_i32 = arith.constant 0 : i32
    %c0_i32_0 = arith.constant 0 : i32
    %c0_i32_1 = arith.constant 0 : i32
    return %c0_i32, %c0_i32_0 : i32, i32
  }
  func.func @transform_3(%arg0: i32) -> (i32, i32) {
    %c0_i32 = arith.constant 0 : i32
    %c0_i32_0 = arith.constant 0 : i32
    %c0_i32_1 = arith.constant 0 : i32
    return %c0_i32, %c0_i32_0 : i32, i32
  }
  func.func @transform_4(%arg0: i32) -> (i32, i32) {
    %c0_i32 = arith.constant 0 : i32
    %c0_i32_0 = arith.constant 0 : i32
    %c0_i32_1 = arith.constant 0 : i32
    return %c0_i32, %c0_i32_0 : i32, i32
  }
  func.func @transform_5(%arg0: i32) -> (i32, i32) {
    %c0_i32 = arith.constant 0 : i32
    %c0_i32_0 = arith.constant 0 : i32
    %c0_i32_1 = arith.constant 0 : i32
    return %c0_i32, %c0_i32_0 : i32, i32
  }
  func.func @transform_6(%arg0: i32) -> (i32, i32) {
    %c0_i32 = arith.constant 0 : i32
    %c0_i32_0 = arith.constant 0 : i32
    %c0_i32_1 = arith.constant 0 : i32
    return %c0_i32, %c0_i32_0 : i32, i32
  }
  func.func @transform_7(%arg0: i32) -> (i32, i32) {
    %c0_i32 = arith.constant 0 : i32
    %c0_i32_0 = arith.constant 0 : i32
    %c0_i32_1 = arith.constant 0 : i32
    return %c0_i32, %c0_i32_0 : i32, i32
  }
  func.func @transform_8(%arg0: i32) -> (i32, i32) {
    %c0_i32 = arith.constant 0 : i32
    %c0_i32_0 = arith.constant 0 : i32
    %c0_i32_1 = arith.constant 0 : i32
    return %c0_i32, %c0_i32_0 : i32, i32
  }
  func.func @transform_9(%arg0: i32) -> (i32, i32) {
    %c0_i32 = arith.constant 0 : i32
    %c0_i32_0 = arith.constant 0 : i32
    %c0_i32_1 = arith.constant 0 : i32
    return %c0_i32, %c0_i32_0 : i32, i32
  }
  func.func @transform_10(%arg0: i32) -> (i32, i32) {
    %c0_i32 = arith.constant 0 : i32
    %c0_i32_0 = arith.constant 0 : i32
    %c0_i32_1 = arith.constant 0 : i32
    return %c0_i32, %c0_i32_0 : i32, i32
  }
  func.func @transform_11(%arg0: i32) -> (i32, i32) {
    %c0_i32 = arith.constant 0 : i32
    %c0_i32_0 = arith.constant 0 : i32
    %c0_i32_1 = arith.constant 0 : i32
    return %c0_i32, %c0_i32_0 : i32, i32
  }
  func.func @transform_12(%arg0: i32) -> (i32, i32) {
    %c0_i32 = arith.constant 0 : i32
    %c0_i32_0 = arith.constant 0 : i32
    %c0_i32_1 = arith.constant 0 : i32
    return %c0_i32, %c0_i32_0 : i32, i32
  }
  func.func @transform_13(%arg0: i32) -> (i32, i32) {
    %c0_i32 = arith.constant 0 : i32
    %c0_i32_0 = arith.constant 0 : i32
    return %arg0, %c0_i32 : i32, i32
  }
}

</mosaic_0001>

<llo_original>
// kernel: tile.13
$region0: #{tile.13}
  #allocation0 [shape = 's32[1]{0}', space=sflag, size = 0x4, scoped, tag = 'scoped memory for tile.13']
  %s0 = inlined_call_operand.vmem [shape: f32[6], index: 0, kind: input, shape index: {}]
  %s1 = inlined_call_operand.vmem [shape: f32[24,6], index: 1, kind: output, shape index: {}]
  // Predicated region
  $region2: #{tile.13} parent=0 // pred_check
    _
  $region3: #{tile.13} parent=0 // pred_check_branch
    %3 = sbr.rel (0) target = $region5
  $region4: #{tile.13} parent=0 // pred_region
    _
  $region5: #{tile.13} parent=0 // pred_fallthru
    _
  %v4 = vld [vmem:[%s0] ss:$0 sm:$0xff]
  %5 = vst [vmem:[%s1] sm:$0xff] %v4
  %s6 = scalar_lea.vmem %s1, 8
  %7 = vst [vmem:[%s6] sm:$0xff] %v4
  %s8 = scalar_lea.vmem %s1, 16
  %9 = vst [vmem:[%s8] sm:$0xff] %v4

// kernel: tile.14
$region0: #{tile.14}
  %s0 = inlined_call_operand.vmem [shape: f32[24,6], index: 0, kind: input, shape index: {}]
  %s1 = inlined_call_operand.vmem [shape: f32[1,144], index: 1, kind: output, shape index: {}]
  $region1: #{tile.14} parent=0
    #allocation0 [shape = 'u8[8192]{0}', space=vmem, size = 0x2000, scoped, tag = 'scoped mem for output reshape']
    %v2 = vld [vmem:[%s0] sm:$0x1]
    %vm3 = vcmask 48128
    %4 = vst.msk [vmem:[#allocation0] sm:$0x1] %vm3, %v2
    %s5 = scalar_lea.vmem %s0, 21
    %v6 = vld [vmem:[%s5] sm:$0x1]
    %s7 = scalar_lea.vmem %s0, 21
    %v8 = vld [vmem:[%s7] sm:$0x1]
    %vm9 = vcmask 15360
    %v10 = vsel %vm9, %v8, %v6
    %11 = vrot.lane.b32.xlu0 %v10, 126
    %v12 = vpop.permute.xlu0 %11
    %vm13 = vcmask 31744
    %s14 = scalar_lea.vmem [#allocation0], 8
    %15 = vst.msk [vmem:[%s14] sm:$0x1] %vm13, %v12
    %vm16 = vcmask 1048560
    %17 = vst.msk [vmem:[#allocation0] sm:$0x1] %vm16, %v12
    %s18 = scalar_lea.vmem %s0, 20
    %v19 = vld [vmem:[%s18] sm:$0x1]
    %20 = vrot.lane.b32.xlu0 %v19, 120
    %v21 = vpop.permute.xlu0 %20
    %vm22 = vcmask 1032128
    %23 = vst.msk [vmem:[#allocation0] sm:$0x1] %vm22, %v21
    %s24 = scalar_lea.vmem %s0, 19
    %v25 = vld [vmem:[%s24] sm:$0x1]
    %26 = vrot.lane.b32.xlu0 %v25, 114
    %v27 = vpop.permute.xlu0 %26
    %vm28 = vcmask 982928
    %29 = vst.msk [vmem:[#allocation0] sm:$0x1] %vm28, %v27
    %s30 = scalar_lea.vmem %s0, 18
    %v31 = vld [vmem:[%s30] sm:$0x1]
    %32 = vrot.lane.b32.xlu0 %v31, 108
    %v33 = vpop.permute.xlu0 %32
    %vm34 = vcmask 933728
    %35 = vst.msk [vmem:[#allocation0] sm:$0x1] %vm34, %v33
    %s36 = scalar_lea.vmem %s0, 17
    %v37 = vld [vmem:[%s36] sm:$0x1]
    %38 = vrot.lane.b32.xlu0 %v37, 102
    %v39 = vpop.permute.xlu0 %38
    %vm40 = vcmask 884528
    %41 = vst.msk [vmem:[#allocation0] sm:$0x1] %vm40, %v39
    %s42 = scalar_lea.vmem %s0, 16
    %v43 = vld [vmem:[%s42] sm:$0x1]
    %44 = vrot.lane.b32.xlu0 %v43, 96
    %v45 = vpop.permute.xlu0 %44
    %vm46 = vcmask 835328
    %47 = vst.msk [vmem:[#allocation0] sm:$0x1] %vm46, %v45
    %s48 = scalar_lea.vmem %s0, 15
    %v49 = vld [vmem:[%s48] sm:$0x1]
    %50 = vrot.lane.b32.xlu0 %v49, 90
    %v51 = vpop.permute.xlu0 %50
    %vm52 = vcmask 786128
    %53 = vst.msk [vmem:[#allocation0] sm:$0x1] %vm52, %v51
    %s54 = scalar_lea.vmem %s0, 14
    %v55 = vld [vmem:[%s54] sm:$0x1]
    %56 = vrot.lane.b32.xlu0 %v55, 84
    %v57 = vpop.permute.xlu0 %56
    %vm58 = vcmask 736928
    %59 = vst.msk [vmem:[#allocation0] sm:$0x1] %vm58, %v57
    %s60 = scalar_lea.vmem %s0, 13
    %v61 = vld [vmem:[%s60] sm:$0x1]
    %62 = vrot.lane.b32.xlu0 %v61, 78
    %v63 = vpop.permute.xlu0 %62
    %vm64 = vcmask 687728
    %65 = vst.msk [vmem:[#allocation0] sm:$0x1] %vm64, %v63
    %s66 = scalar_lea.vmem %s0, 12
    %v67 = vld [vmem:[%s66] sm:$0x1]
    %68 = vrot.lane.b32.xlu0 %v67, 72
    %v69 = vpop.permute.xlu0 %68
    %vm70 = vcmask 638528
    %71 = vst.msk [vmem:[#allocation0] sm:$0x1] %vm70, %v69
    %s72 = scalar_lea.vmem %s0, 11
    %v73 = vld [vmem:[%s72] sm:$0x1]
    %74 = vrot.lane.b32.xlu0 %v73, 66
    %v75 = vpop.permute.xlu0 %74
    %vm76 = vcmask 589328
    %77 = vst.msk [vmem:[#allocation0] sm:$0x1] %vm76, %v75
    %s78 = scalar_lea.vmem %s0, 10
    %v79 = vld [vmem:[%s78] sm:$0x1]
    %80 = vrot.lane.b32.xlu0 %v79, 60
    %v81 = vpop.permute.xlu0 %80
    %vm82 = vcmask 540128
    %83 = vst.msk [vmem:[#allocation0] sm:$0x1] %vm82, %v81
    %s84 = scalar_lea.vmem %s0, 9
    %v85 = vld [vmem:[%s84] sm:$0x1]
    %86 = vrot.lane.b32.xlu0 %v85, 54
    %v87 = vpop.permute.xlu0 %86
    %vm88 = vcmask 490928
    %89 = vst.msk [vmem:[#allocation0] sm:$0x1] %vm88, %v87
    %s90 = scalar_lea.vmem %s0, 8
    %v91 = vld [vmem:[%s90] sm:$0x1]
    %92 = vrot.lane.b32.xlu0 %v91, 48
    %v93 = vpop.permute.xlu0 %92
    %vm94 = vcmask 441728
    %95 = vst.msk [vmem:[#allocation0] sm:$0x1] %vm94, %v93
    %s96 = scalar_lea.vmem %s0, 7
    %v97 = vld [vmem:[%s96] sm:$0x1]
    %98 = vrot.lane.b32.xlu0 %v97, 42
    %v99 = vpop.permute.xlu0 %98
    %vm100 = vcmask 392528
    %101 = vst.msk [vmem:[#allocation0] sm:$0x1] %vm100, %v99
    %s102 = scalar_lea.vmem %s0, 6
    %v103 = vld [vmem:[%s102] sm:$0x1]
    %104 = vrot.lane.b32.xlu0 %v103, 36
    %v105 = vpop.permute.xlu0 %104
    %vm106 = vcmask 343328
    %107 = vst.msk [vmem:[#allocation0] sm:$0x1] %vm106, %v105
    %s108 = scalar_lea.vmem %s0, 5
    %v109 = vld [vmem:[%s108] sm:$0x1]
    %110 = vrot.lane.b32.xlu0 %v109, 30
    %v111 = vpop.permute.xlu0 %110
    %vm112 = vcmask 294128
    %113 = vst.msk [vmem:[#allocation0] sm:$0x1] %vm112, %v111
    %s114 = scalar_lea.vmem %s0, 4
    %v115 = vld [vmem:[%s114] sm:$0x1]
    %116 = vrot.lane.b32.xlu0 %v115, 24
    %v117 = vpop.permute.xlu0 %116
    %vm118 = vcmask 244928
    %119 = vst.msk [vmem:[#allocation0] sm:$0x1] %vm118, %v117
    %s120 = scalar_lea.vmem %s0, 3
    %v121 = vld [vmem:[%s120] sm:$0x1]
    %122 = vrot.lane.b32.xlu0 %v121, 18
    %v123 = vpop.permute.xlu0 %122
    %vm124 = vcmask 195728
    %125 = vst.msk [vmem:[#allocation0] sm:$0x1] %vm124, %v123
    %s126 = scalar_lea.vmem %s0, 2
    %v127 = vld [vmem:[%s126] sm:$0x1]
    %128 = vrot.lane.b32.xlu0 %v127, 12
    %v129 = vpop.permute.xlu0 %128
    %vm130 = vcmask 146528
    %131 = vst.msk [vmem:[#allocation0] sm:$0x1] %vm130, %v129
    %s132 = scalar_lea.vmem %s0, 23
    %v133 = vld [vmem:[%s132] sm:$0x1]
    %134 = vrot.lane.b32.xlu0 %v133, 10
    %v135 = vpop.permute.xlu0 %134
    %vm136 = vcmask 130128
    %s137 = scalar_lea.vmem [#allocation0], 8
    %138 = vst.msk [vmem:[%s137] sm:$0x1] %vm136, %v135
    %s139 = scalar_lea.vmem %s0, 1
    %v140 = vld [vmem:[%s139] sm:$0x1]
    %141 = vrot.lane.b32.xlu0 %v140, 6
    %v142 = vpop.permute.xlu0 %141
    %vm143 = vcmask 97328
    %144 = vst.msk [vmem:[#allocation0] sm:$0x1] %vm143, %v142
    %s145 = scalar_lea.vmem %s0, 22
    %v146 = vld [vmem:[%s145] sm:$0x1]
    %147 = vrot.lane.b32.xlu0 %v146, 4
    %v148 = vpop.permute.xlu0 %147
    %vm149 = vcmask 80928
    %s150 = scalar_lea.vmem [#allocation0], 8
    %151 = vst.msk [vmem:[%s150] sm:$0x1] %vm149, %v148
    %s153 = sshll.u32 1, 1
    %s154 = ssub.s32 %s153, 1
    %v156 = vld [vmem:[#allocation0] sm:%s154]
    %s157 = sshll.u32 1, 1
    %s158 = ssub.s32 %s157, 1
    %159 = vst [vmem:[%s1] sm:%s158] %v156
    %s160 = scalar_lea.vmem [#allocation0], 8
    %v161 = vld [vmem:[%s160] sm:%s154]
    %s162 = sshll.u32 1, 1
    %s163 = ssub.s32 %s162, 1
    %s164 = scalar_lea.vmem %s1, 1
    %165 = vst [vmem:[%s164] sm:%s163] %v161

// kernel: tile.18
$region0: #{tile.18}
  #allocation0 [shape = 's32[1]{0}', space=sflag, size = 0x4, scoped, tag = 'scoped memory for tile.18']
  %s0 = inlined_call_operand.vmem [shape: f32[16], index: 0, kind: input, shape index: {}]
  %s1 = inlined_call_operand.vmem [shape: f32[8,16], index: 1, kind: output, shape index: {}]
  // Predicated region
  $region2: #{tile.18} parent=0 // pred_check
    _
  $region3: #{tile.18} parent=0 // pred_check_branch
    %3 = sbr.rel (0) target = $region5
  $region4: #{tile.18} parent=0 // pred_region
    _
  $region5: #{tile.18} parent=0 // pred_fallthru
    _
  %v4 = vld [vmem:[%s0] ss:$0 sm:$0xff]
  %5 = vst [vmem:[%s1] sm:$0xff] %v4

// kernel: tile.19
$region0: #{tile.19}
  %s0 = inlined_call_operand.vmem [shape: f32[8,16], index: 0, kind: input, shape index: {}]
  %s1 = inlined_call_operand.vmem [shape: f32[1,128], index: 1, kind: output, shape index: {}]
  $region1: #{tile.19} parent=0
    #allocation0 [shape = 'u8[4096]{0}', space=vmem, size = 0x1000, scoped, tag = 'scoped mem for output reshape']
    %v2 = vld [vmem:[%s0] sm:$0x1]
    %vm3 = vcmask 130048
    %4 = vst.msk [vmem:[#allocation0] sm:$0x1] %vm3, %v2
    %s5 = scalar_lea.vmem %s0, 7
    %v6 = vld [vmem:[%s5] sm:$0x1]
    %7 = vrot.lane.b32.xlu0 %v6, 112
    %v8 = vpop.permute.xlu0 %7
    %vm9 = vcmask 1048448
    %10 = vst.msk [vmem:[#allocation0] sm:$0x1] %vm9, %v8
    %s11 = scalar_lea.vmem %s0, 6
    %v12 = vld [vmem:[%s11] sm:$0x1]
    %13 = vrot.lane.b32.xlu0 %v12, 96
    %v14 = vpop.permute.xlu0 %13
    %vm15 = vcmask 917248
    %16 = vst.msk [vmem:[#allocation0] sm:$0x1] %vm15, %v14
    %s17 = scalar_lea.vmem %s0, 5
    %v18 = vld [vmem:[%s17] sm:$0x1]
    %19 = vrot.lane.b32.xlu0 %v18, 80
    %v20 = vpop.permute.xlu0 %19
    %vm21 = vcmask 786048
    %22 = vst.msk [vmem:[#allocation0] sm:$0x1] %vm21, %v20
    %s23 = scalar_lea.vmem %s0, 4
    %v24 = vld [vmem:[%s23] sm:$0x1]
    %25 = vrot.lane.b32.xlu0 %v24, 64
    %v26 = vpop.permute.xlu0 %25
    %vm27 = vcmask 654848
    %28 = vst.msk [vmem:[#allocation0] sm:$0x1] %vm27, %v26
    %s29 = scalar_lea.vmem %s0, 3
    %v30 = vld [vmem:[%s29] sm:$0x1]
    %31 = vrot.lane.b32.xlu0 %v30, 48
    %v32 = vpop.permute.xlu0 %31
    %vm33 = vcmask 523648
    %34 = vst.msk [vmem:[#allocation0] sm:$0x1] %vm33, %v32
    %s35 = scalar_lea.vmem %s0, 2
    %v36 = vld [vmem:[%s35] sm:$0x1]
    %37 = vrot.lane.b32.xlu0 %v36, 32
    %v38 = vpop.permute.xlu0 %37
    %vm39 = vcmask 392448
    %40 = vst.msk [vmem:[#allocation0] sm:$0x1] %vm39, %v38
    %s41 = scalar_lea.vmem %s0, 1
    %v42 = vld [vmem:[%s41] sm:$0x1]
    %43 = vrot.lane.b32.xlu0 %v42, 16
    %v44 = vpop.permute.xlu0 %43
    %vm45 = vcmask 261248
    %46 = vst.msk [vmem:[#allocation0] sm:$0x1] %vm45, %v44
    %s48 = sshll.u32 1, 1
    %s49 = ssub.s32 %s48, 1
    %v51 = vld [vmem:[#allocation0] sm:%s49]
    %s52 = sshll.u32 1, 1
    %s53 = ssub.s32 %s52, 1
    %54 = vst [vmem:[%s1] sm:%s53] %v51

// kernel: garment_classifier_forward.1
$region0: #{garment_classifier_forward.1}
  #allocation0 [shape = 'u32[]', space=smem, size = 0x4, offset = 0x4, fixed_abs, tag = 'smem constant byte address 0x4 - core index']
  #allocation1 [shape = 'u32[144,128]{1,0:T(1,128)}', space=vmem, size = 0x12000, scoped, tag = 'internal scratch']
  %s0 = inlined_call_operand.vmem [shape: f32[28,8,28], index: 0, kind: input, shape index: {}]
  %s1 = inlined_call_operand.vmem [shape: bf16[140,144], index: 1, kind: input, shape index: {}]
  %s2 = inlined_call_operand.vmem [shape: f32[1,144], index: 2, kind: input, shape index: {}]
  %s3 = inlined_call_operand.vmem [shape: bf16[138,72], index: 3, kind: input, shape index: {}]
  %s4 = inlined_call_operand.vmem [shape: bf16[360,128], index: 4, kind: input, shape index: {}]
  %s5 = inlined_call_operand.vmem [shape: f32[1,128], index: 5, kind: input, shape index: {}]
  %s6 = inlined_call_operand.vmem [shape: bf16[112,64], index: 6, kind: input, shape index: {}]
  %s7 = inlined_call_operand.vmem [shape: bf16[256,128], index: 7, kind: input, shape index: {}]
  %s8 = inlined_call_operand.vmem [shape: f32[1,128], index: 8, kind: input, shape index: {}]
  %s9 = inlined_call_operand.vmem [shape: bf16[128,128], index: 9, kind: input, shape index: {}]
  %s10 = inlined_call_operand.vmem [shape: f32[1,128], index: 10, kind: input, shape index: {}]
  %s11 = inlined_call_operand.vmem [shape: bf16[128,128], index: 11, kind: input, shape index: {}]
  %s12 = inlined_call_operand.vmem [shape: f32[1,128], index: 12, kind: input, shape index: {}]
  %s13 = inlined_call_operand.vmem [shape: f32[8,128], index: 13, kind: output, shape index: {}]
  %s14 = sld [smem:[#allocation0]]
  $region62: #{garment_classifier_forward.1} parent=0
    _
  %s16 = ssub.s32 1, %s14
  %s17 = scalar_select 0, %s16, %s14
  // Predicated region
  $region2: #{garment_classifier_forward.1} parent=0 // pred_check
    _
  $region3: #{garment_classifier_forward.1} parent=0 // pred_check_branch
    %19 = sbr.rel (0) target = $region5
  $region4: #{garment_classifier_forward.1} parent=0 // pred_region
    _
  $region5: #{garment_classifier_forward.1} parent=0 // pred_fallthru
    _
  // Predicated region
  $region6: #{garment_classifier_forward.1} parent=0 // pred_check
    _
  $region7: #{garment_classifier_forward.1} parent=0 // pred_check_branch
    %21 = sbr.rel (0) target = $region9
  $region8: #{garment_classifier_forward.1} parent=0 // pred_region
    _
  $region9: #{garment_classifier_forward.1} parent=0 // pred_fallthru
    _
  // Predicated region
  $region10: #{garment_classifier_forward.1} parent=0 // pred_check
    _
  $region11: #{garment_classifier_forward.1} parent=0 // pred_check_branch
    %23 = sbr.rel (0) target = $region13
  $region12: #{garment_classifier_forward.1} parent=0 // pred_region
    _
  $region13: #{garment_classifier_forward.1} parent=0 // pred_fallthru
    _
  // Predicated region
  $region14: #{garment_classifier_forward.1} parent=0 // pred_check
    _
  $region15: #{garment_classifier_forward.1} parent=0 // pred_check_branch
    %25 = sbr.rel (0) target = $region17
  $region16: #{garment_classifier_forward.1} parent=0 // pred_region
    _
  $region17: #{garment_classifier_forward.1} parent=0 // pred_fallthru
    _
  // Predicated region
  $region18: #{garment_classifier_forward.1} parent=0 // pred_check
    _
  $region19: #{garment_classifier_forward.1} parent=0 // pred_check_branch
    %27 = sbr.rel (0) target = $region21
  $region20: #{garment_classifier_forward.1} parent=0 // pred_region
    _
  $region21: #{garment_classifier_forward.1} parent=0 // pred_fallthru
    _
  // Predicated region
  $region22: #{garment_classifier_forward.1} parent=0 // pred_check
    _
  $region23: #{garment_classifier_forward.1} parent=0 // pred_check_branch
    %29 = sbr.rel (0) target = $region25
  $region24: #{garment_classifier_forward.1} parent=0 // pred_region
    _
  $region25: #{garment_classifier_forward.1} parent=0 // pred_fallthru
    _
  // Predicated region
  $region26: #{garment_classifier_forward.1} parent=0 // pred_check
    _
  $region27: #{garment_classifier_forward.1} parent=0 // pred_check_branch
    %31 = sbr.rel (0) target = $region29
  $region28: #{garment_classifier_forward.1} parent=0 // pred_region
    _
  $region29: #{garment_classifier_forward.1} parent=0 // pred_fallthru
    _
  // Predicated region
  $region30: #{garment_classifier_forward.1} parent=0 // pred_check
    _
  $region31: #{garment_classifier_forward.1} parent=0 // pred_check_branch
    %33 = sbr.rel (0) target = $region33
  $region32: #{garment_classifier_forward.1} parent=0 // pred_region
    _
  $region33: #{garment_classifier_forward.1} parent=0 // pred_fallthru
    _
  // Predicated region
  $region34: #{garment_classifier_forward.1} parent=0 // pred_check
    _
  $region35: #{garment_classifier_forward.1} parent=0 // pred_check_branch
    %35 = sbr.rel (0) target = $region37
  $region36: #{garment_classifier_forward.1} parent=0 // pred_region
    _
  $region37: #{garment_classifier_forward.1} parent=0 // pred_fallthru
    _
  // Predicated region
  $region38: #{garment_classifier_forward.1} parent=0 // pred_check
    _
  $region39: #{garment_classifier_forward.1} parent=0 // pred_check_branch
    %37 = sbr.rel (0) target = $region41
  $region40: #{garment_classifier_forward.1} parent=0 // pred_region
    _
  $region41: #{garment_classifier_forward.1} parent=0 // pred_fallthru
    _
  // Predicated region
  $region42: #{garment_classifier_forward.1} parent=0 // pred_check
    _
  $region43: #{garment_classifier_forward.1} parent=0 // pred_check_branch
    %39 = sbr.rel (0) target = $region45
  $region44: #{garment_classifier_forward.1} parent=0 // pred_region
    _
  $region45: #{garment_classifier_forward.1} parent=0 // pred_fallthru
    _
  // Predicated region
  $region46: #{garment_classifier_forward.1} parent=0 // pred_check
    _
  $region47: #{garment_classifier_forward.1} parent=0 // pred_check_branch
    %41 = sbr.rel (0) target = $region49
  $region48: #{garment_classifier_forward.1} parent=0 // pred_region
    _
  $region49: #{garment_classifier_forward.1} parent=0 // pred_fallthru
    _
  // Predicated region
  $region50: #{garment_classifier_forward.1} parent=0 // pred_check
    _
  $region51: #{garment_classifier_forward.1} parent=0 // pred_check_branch
    %43 = sbr.rel (0) target = $region53
  $region52: #{garment_classifier_forward.1} parent=0 // pred_region
    _
  $region53: #{garment_classifier_forward.1} parent=0 // pred_fallthru
    _
  %v45 = vld [vmem:[%s0] sm:$0xff]
  %v46 = vld [vmem:[%s0 + $0x8] sm:$0xff]
  %v47 = vld [vmem:[%s0 + $0x10] sm:$0xff]
  %v48 = vld [vmem:[%s0 + $0x18] sm:$0xff]
  %v49 = vld [vmem:[%s0 + $0x20] sm:$0xff]
  %v50 = vld [vmem:[%s0 + $0x28] sm:$0xff]
  %v51 = vld [vmem:[%s0 + $0x30] sm:$0xff]
  %v52 = vld [vmem:[%s0 + $0x38] sm:$0xff]
  %v53 = vld [vmem:[%s0 + $0x40] sm:$0xff]
  %v54 = vld [vmem:[%s0 + $0x48] sm:$0xff]
  %v55 = vld [vmem:[%s0 + $0x50] sm:$0xff]
  %v56 = vld [vmem:[%s0 + $0x58] sm:$0xff]
  %v57 = vld [vmem:[%s0 + $0x60] sm:$0xff]
  %v58 = vld [vmem:[%s0 + $0x68] sm:$0xff]
  %v59 = vld [vmem:[%s0 + $0x70] sm:$0xff]
  %v60 = vld [vmem:[%s0 + $0x78] sm:$0xff]
  %v61 = vld [vmem:[%s0 + $0x80] sm:$0xff]
  %v62 = vld [vmem:[%s0 + $0x88] sm:$0xff]
  %v63 = vld [vmem:[%s0 + $0x90] sm:$0xff]
  %v64 = vld [vmem:[%s0 + $0x98] sm:$0xff]
  %v65 = vld [vmem:[%s0 + $0xa0] sm:$0xff]
  %v66 = vld [vmem:[%s0 + $0xa8] sm:$0xff]
  %v67 = vld [vmem:[%s0 + $0xb0] sm:$0xff]
  %v68 = vld [vmem:[%s0 + $0xb8] sm:$0xff]
  %v69 = vld [vmem:[%s0 + $0xc0] sm:$0xff]
  %v70 = vld [vmem:[%s0 + $0xc8] sm:$0xff]
  %v71 = vld [vmem:[%s0 + $0xd0] sm:$0xff]
  %v72 = vld [vmem:[%s0 + $0xd8] sm:$0xff]
  %97 = vrot.lane.b32.xlu0 %v46, 28
  %v98 = vpop.permute.xlu0 %97
  %99 = vrot.lane.b32.xlu0 %v47, 28
  %v100 = vpop.permute.xlu0 %99
  %101 = vrot.lane.b32.xlu0 %v48, 28
  %v102 = vpop.permute.xlu0 %101
  %103 = vrot.lane.b32.xlu0 %v49, 28
  %v104 = vpop.permute.xlu0 %103
  %105 = vrot.lane.b32.xlu0 %v50, 28
  %v106 = vpop.permute.xlu0 %105
  %107 = vrot.lane.b32.xlu0 %v51, 28
  %v108 = vpop.permute.xlu0 %107
  %109 = vrot.lane.b32.xlu0 %v52, 28
  %v110 = vpop.permute.xlu0 %109
  %111 = vrot.lane.b32.xlu0 %v53, 28
  %v112 = vpop.permute.xlu0 %111
  %113 = vrot.lane.b32.xlu0 %v54, 28
  %v114 = vpop.permute.xlu0 %113
  %115 = vrot.lane.b32.xlu0 %v55, 28
  %v116 = vpop.permute.xlu0 %115
  %117 = vrot.lane.b32.xlu0 %v56, 28
  %v118 = vpop.permute.xlu0 %117
  %119 = vrot.lane.b32.xlu0 %v57, 28
  %v120 = vpop.permute.xlu0 %119
  %121 = vrot.lane.b32.xlu0 %v58, 28
  %v122 = vpop.permute.xlu0 %121
  %123 = vrot.lane.b32.xlu0 %v59, 28
  %v124 = vpop.permute.xlu0 %123
  %125 = vrot.lane.b32.xlu0 %v60, 28
  %v126 = vpop.permute.xlu0 %125
  %127 = vrot.lane.b32.xlu0 %v61, 28
  %v128 = vpop.permute.xlu0 %127
  %129 = vrot.lane.b32.xlu0 %v62, 28
  %v130 = vpop.permute.xlu0 %129
  %131 = vrot.lane.b32.xlu0 %v63, 28
  %v132 = vpop.permute.xlu0 %131
  %133 = vrot.lane.b32.xlu0 %v64, 28
  %v134 = vpop.permute.xlu0 %133
  %135 = vrot.lane.b32.xlu0 %v65, 28
  %v136 = vpop.permute.xlu0 %135
  %137 = vrot.lane.b32.xlu0 %v66, 28
  %v138 = vpop.permute.xlu0 %137
  %139 = vrot.lane.b32.xlu0 %v67, 28
  %v140 = vpop.permute.xlu0 %139
  %141 = vrot.lane.b32.xlu0 %v68, 28
  %v142 = vpop.permute.xlu0 %141
  %143 = vrot.lane.b32.xlu0 %v69, 28
  %v144 = vpop.permute.xlu0 %143
  %170 = vrot.lane.b32.xlu0 %v47, 56
  %v171 = vpop.permute.xlu0 %170
  %172 = vrot.lane.b32.xlu0 %v48, 56
  %v173 = vpop.permute.xlu0 %172
  %174 = vrot.lane.b32.xlu0 %v49, 56
  %v175 = vpop.permute.xlu0 %174
  %176 = vrot.lane.b32.xlu0 %v50, 56
  %v177 = vpop.permute.xlu0 %176
  %178 = vrot.lane.b32.xlu0 %v51, 56
  %v179 = vpop.permute.xlu0 %178
  %180 = vrot.lane.b32.xlu0 %v52, 56
  %v181 = vpop.permute.xlu0 %180
  %182 = vrot.lane.b32.xlu0 %v53, 56
  %v183 = vpop.permute.xlu0 %182
  %184 = vrot.lane.b32.xlu0 %v54, 56
  %v185 = vpop.permute.xlu0 %184
  %186 = vrot.lane.b32.xlu0 %v55, 56
  %v187 = vpop.permute.xlu0 %186
  %188 = vrot.lane.b32.xlu0 %v56, 56
  %v189 = vpop.permute.xlu0 %188
  %190 = vrot.lane.b32.xlu0 %v57, 56
  %v191 = vpop.permute.xlu0 %190
  %192 = vrot.lane.b32.xlu0 %v58, 56
  %v193 = vpop.permute.xlu0 %192
  %194 = vrot.lane.b32.xlu0 %v59, 56
  %v195 = vpop.permute.xlu0 %194
  %196 = vrot.lane.b32.xlu0 %v60, 56
  %v197 = vpop.permute.xlu0 %196
  %198 = vrot.lane.b32.xlu0 %v61, 56
  %v199 = vpop.permute.xlu0 %198
  %200 = vrot.lane.b32.xlu0 %v62, 56
  %v201 = vpop.permute.xlu0 %200
  %202 = vrot.lane.b32.xlu0 %v63, 56
  %v203 = vpop.permute.xlu0 %202
  %204 = vrot.lane.b32.xlu0 %v64, 56
  %v205 = vpop.permute.xlu0 %204
  %206 = vrot.lane.b32.xlu0 %v65, 56
  %v207 = vpop.permute.xlu0 %206
  %208 = vrot.lane.b32.xlu0 %v66, 56
  %v209 = vpop.permute.xlu0 %208
  %210 = vrot.lane.b32.xlu0 %v67, 56
  %v211 = vpop.permute.xlu0 %210
  %212 = vrot.lane.b32.xlu0 %v68, 56
  %v213 = vpop.permute.xlu0 %212
  %214 = vrot.lane.b32.xlu0 %v69, 56
  %v215 = vpop.permute.xlu0 %214
  %216 = vrot.lane.b32.xlu0 %v70, 56
  %v217 = vpop.permute.xlu0 %216
  %243 = vrot.lane.b32.xlu0 %v48, 84
  %v244 = vpop.permute.xlu0 %243
  %245 = vrot.lane.b32.xlu0 %v49, 84
  %v246 = vpop.permute.xlu0 %245
  %247 = vrot.lane.b32.xlu0 %v50, 84
  %v248 = vpop.permute.xlu0 %247
  %249 = vrot.lane.b32.xlu0 %v51, 84
  %v250 = vpop.permute.xlu0 %249
  %251 = vrot.lane.b32.xlu0 %v52, 84
  %v252 = vpop.permute.xlu0 %251
  %253 = vrot.lane.b32.xlu0 %v53, 84
  %v254 = vpop.permute.xlu0 %253
  %255 = vrot.lane.b32.xlu0 %v54, 84
  %v256 = vpop.permute.xlu0 %255
  %257 = vrot.lane.b32.xlu0 %v55, 84
  %v258 = vpop.permute.xlu0 %257
  %259 = vrot.lane.b32.xlu0 %v56, 84
  %v260 = vpop.permute.xlu0 %259
  %261 = vrot.lane.b32.xlu0 %v57, 84
  %v262 = vpop.permute.xlu0 %261
  %263 = vrot.lane.b32.xlu0 %v58, 84
  %v264 = vpop.permute.xlu0 %263
  %265 = vrot.lane.b32.xlu0 %v59, 84
  %v266 = vpop.permute.xlu0 %265
  %267 = vrot.lane.b32.xlu0 %v60, 84
  %v268 = vpop.permute.xlu0 %267
  %269 = vrot.lane.b32.xlu0 %v61, 84
  %v270 = vpop.permute.xlu0 %269
  %271 = vrot.lane.b32.xlu0 %v62, 84
  %v272 = vpop.permute.xlu0 %271
  %273 = vrot.lane.b32.xlu0 %v63, 84
  %v274 = vpop.permute.xlu0 %273
  %275 = vrot.lane.b32.xlu0 %v64, 84
  %v276 = vpop.permute.xlu0 %275
  %277 = vrot.lane.b32.xlu0 %v65, 84
  %v278 = vpop.permute.xlu0 %277
  %279 = vrot.lane.b32.xlu0 %v66, 84
  %v280 = vpop.permute.xlu0 %279
  %281 = vrot.lane.b32.xlu0 %v67, 84
  %v282 = vpop.permute.xlu0 %281
  %283 = vrot.lane.b32.xlu0 %v68, 84
  %v284 = vpop.permute.xlu0 %283
  %285 = vrot.lane.b32.xlu0 %v69, 84
  %v286 = vpop.permute.xlu0 %285
  %287 = vrot.lane.b32.xlu0 %v70, 84
  %v288 = vpop.permute.xlu0 %287
  %289 = vrot.lane.b32.xlu0 %v71, 84
  %v290 = vpop.permute.xlu0 %289
  %316 = vrot.lane.b32.xlu0 %v49, 112
  %v317 = vpop.permute.xlu0 %316
  %318 = vrot.lane.b32.xlu0 %v50, 112
  %v319 = vpop.permute.xlu0 %318
  %320 = vrot.lane.b32.xlu0 %v51, 112
  %v321 = vpop.permute.xlu0 %320
  %322 = vrot.lane.b32.xlu0 %v52, 112
  %v323 = vpop.permute.xlu0 %322
  %324 = vrot.lane.b32.xlu0 %v53, 112
  %v325 = vpop.permute.xlu0 %324
  %326 = vrot.lane.b32.xlu0 %v54, 112
  %v327 = vpop.permute.xlu0 %326
  %328 = vrot.lane.b32.xlu0 %v55, 112
  %v329 = vpop.permute.xlu0 %328
  %330 = vrot.lane.b32.xlu0 %v56, 112
  %v331 = vpop.permute.xlu0 %330
  %332 = vrot.lane.b32.xlu0 %v57, 112
  %v333 = vpop.permute.xlu0 %332
  %334 = vrot.lane.b32.xlu0 %v58, 112
  %v335 = vpop.permute.xlu0 %334
  %336 = vrot.lane.b32.xlu0 %v59, 112
  %v337 = vpop.permute.xlu0 %336
  %338 = vrot.lane.b32.xlu0 %v60, 112
  %v339 = vpop.permute.xlu0 %338
  %340 = vrot.lane.b32.xlu0 %v61, 112
  %v341 = vpop.permute.xlu0 %340
  %342 = vrot.lane.b32.xlu0 %v62, 112
  %v343 = vpop.permute.xlu0 %342
  %344 = vrot.lane.b32.xlu0 %v63, 112
  %v345 = vpop.permute.xlu0 %344
  %346 = vrot.lane.b32.xlu0 %v64, 112
  %v347 = vpop.permute.xlu0 %346
  %348 = vrot.lane.b32.xlu0 %v65, 112
  %v349 = vpop.permute.xlu0 %348
  %350 = vrot.lane.b32.xlu0 %v66, 112
  %v351 = vpop.permute.xlu0 %350
  %352 = vrot.lane.b32.xlu0 %v67, 112
  %v353 = vpop.permute.xlu0 %352
  %354 = vrot.lane.b32.xlu0 %v68, 112
  %v355 = vpop.permute.xlu0 %354
  %356 = vrot.lane.b32.xlu0 %v69, 112
  %v357 = vpop.permute.xlu0 %356
  %358 = vrot.lane.b32.xlu0 %v70, 112
  %v359 = vpop.permute.xlu0 %358
  %360 = vrot.lane.b32.xlu0 %v71, 112
  %v361 = vpop.permute.xlu0 %360
  %362 = vrot.lane.b32.xlu0 %v72, 112
  %v363 = vpop.permute.xlu0 %362
  %vm388 = vcmask 228352
  %v389 = vsel %vm388, %v45, %v98
  %v390 = vsel %vm388, %v46, %v100
  %v391 = vsel %vm388, %v47, %v102
  %v392 = vsel %vm388, %v48, %v104
  %v393 = vsel %vm388, %v49, %v106
  %v394 = vsel %vm388, %v50, %v108
  %v395 = vsel %vm388, %v51, %v110
  %v396 = vsel %vm388, %v52, %v112
  %v397 = vsel %vm388, %v53, %v114
  %v398 = vsel %vm388, %v54, %v116
  %v399 = vsel %vm388, %v55, %v118
  %v400 = vsel %vm388, %v56, %v120
  %v401 = vsel %vm388, %v57, %v122
  %v402 = vsel %vm388, %v58, %v124
  %v403 = vsel %vm388, %v59, %v126
  %v404 = vsel %vm388, %v60, %v128
  %v405 = vsel %vm388, %v61, %v130
  %v406 = vsel %vm388, %v62, %v132
  %v407 = vsel %vm388, %v63, %v134
  %v408 = vsel %vm388, %v64, %v136
  %v409 = vsel %vm388, %v65, %v138
  %v410 = vsel %vm388, %v66, %v140
  %v411 = vsel %vm388, %v67, %v142
  %v412 = vsel %vm388, %v68, %v144
  %vm413 = vcmask 457728
  %v414 = vsel %vm413, %v389, %v171
  %v415 = vsel %vm413, %v390, %v173
  %v416 = vsel %vm413, %v391, %v175
  %v417 = vsel %vm413, %v392, %v177
  %v418 = vsel %vm413, %v393, %v179
  %v419 = vsel %vm413, %v394, %v181
  %v420 = vsel %vm413, %v395, %v183
  %v421 = vsel %vm413, %v396, %v185
  %v422 = vsel %vm413, %v397, %v187
  %v423 = vsel %vm413, %v398, %v189
  %v424 = vsel %vm413, %v399, %v191
  %v425 = vsel %vm413, %v400, %v193
  %v426 = vsel %vm413, %v401, %v195
  %v427 = vsel %vm413, %v402, %v197
  %v428 = vsel %vm413, %v403, %v199
  %v429 = vsel %vm413, %v404, %v201
  %v430 = vsel %vm413, %v405, %v203
  %v431 = vsel %vm413, %v406, %v205
  %v432 = vsel %vm413, %v407, %v207
  %v433 = vsel %vm413, %v408, %v209
  %v434 = vsel %vm413, %v409, %v211
  %v435 = vsel %vm413, %v410, %v213
  %v436 = vsel %vm413, %v411, %v215
  %v437 = vsel %vm413, %v412, %v217
  %vm438 = vcmask 687104
  %v439 = vsel %vm438, %v414, %v244
  %v440 = vsel %vm438, %v415, %v246
  %v441 = vsel %vm438, %v416, %v248
  %v442 = vsel %vm438, %v417, %v250
  %v443 = vsel %vm438, %v418, %v252
  %v444 = vsel %vm438, %v419, %v254
  %v445 = vsel %vm438, %v420, %v256
  %v446 = vsel %vm438, %v421, %v258
  %v447 = vsel %vm438, %v422, %v260
  %v448 = vsel %vm438, %v423, %v262
  %v449 = vsel %vm438, %v424, %v264
  %v450 = vsel %vm438, %v425, %v266
  %v451 = vsel %vm438, %v426, %v268
  %v452 = vsel %vm438, %v427, %v270
  %v453 = vsel %vm438, %v428, %v272
  %v454 = vsel %vm438, %v429, %v274
  %v455 = vsel %vm438, %v430, %v276
  %v456 = vsel %vm438, %v431, %v278
  %v457 = vsel %vm438, %v432, %v280
  %v458 = vsel %vm438, %v433, %v282
  %v459 = vsel %vm438, %v434, %v284
  %v460 = vsel %vm438, %v435, %v286
  %v461 = vsel %vm438, %v436, %v288
  %v462 = vsel %vm438, %v437, %v290
  %vm463 = vcmask 916480
  %v464 = vsel %vm463, %v439, %v317
  %v465 = vsel %vm463, %v440, %v319
  %v466 = vsel %vm463, %v441, %v321
  %v467 = vsel %vm463, %v442, %v323
  %v468 = vsel %vm463, %v443, %v325
  %v469 = vsel %vm463, %v444, %v327
  %v470 = vsel %vm463, %v445, %v329
  %v471 = vsel %vm463, %v446, %v331
  %v472 = vsel %vm463, %v447, %v333
  %v473 = vsel %vm463, %v448, %v335
  %v474 = vsel %vm463, %v449, %v337
  %v475 = vsel %vm463, %v450, %v339
  %v476 = vsel %vm463, %v451, %v341
  %v477 = vsel %vm463, %v452, %v343
  %v478 = vsel %vm463, %v453, %v345
  %v479 = vsel %vm463, %v454, %v347
  %v480 = vsel %vm463, %v455, %v349
  %v481 = vsel %vm463, %v456, %v351
  %v482 = vsel %vm463, %v457, %v353
  %v483 = vsel %vm463, %v458, %v355
  %v484 = vsel %vm463, %v459, %v357
  %v485 = vsel %vm463, %v460, %v359
  %v486 = vsel %vm463, %v461, %v361
  %v487 = vsel %vm463, %v462, %v363
  %v488 = vpack.c.bf16 %v465, %v464
  %v489 = vpack.c.bf16 %v319, %v317
  %v490 = vpack.c.bf16 %v467, %v466
  %v491 = vpack.c.bf16 %v323, %v321
  %v492 = vpack.c.bf16 %v469, %v468
  %v493 = vpack.c.bf16 %v327, %v325
  %v494 = vpack.c.bf16 %v471, %v470
  %v495 = vpack.c.bf16 %v331, %v329
  %v496 = vpack.c.bf16 %v473, %v472
  %v497 = vpack.c.bf16 %v335, %v333
  %v498 = vpack.c.bf16 %v475, %v474
  %v499 = vpack.c.bf16 %v339, %v337
  %v500 = vpack.c.bf16 %v477, %v476
  %v501 = vpack.c.bf16 %v343, %v341
  %v502 = vpack.c.bf16 %v479, %v478
  %v503 = vpack.c.bf16 %v347, %v345
  %v504 = vpack.c.bf16 %v481, %v480
  %v505 = vpack.c.bf16 %v351, %v349
  %v506 = vpack.c.bf16 %v483, %v482
  %v507 = vpack.c.bf16 %v355, %v353
  %v508 = vpack.c.bf16 %v485, %v484
  %v509 = vpack.c.bf16 %v359, %v357
  %v510 = vpack.c.bf16 %v487, %v486
  %v511 = vpack.c.bf16 %v363, %v361
  %v512 = vld [vmem:[%s1] sm:$0xff]
  %v513 = vld [vmem:[%s1 + $0x8] sm:$0xff]
  %v514 = vld [vmem:[%s1 + $0x10] sm:$0xff]
  %v515 = vld [vmem:[%s1 + $0x18] sm:$0xff]
  %v516 = vld [vmem:[%s1 + $0x20] sm:$0xff]
  %v517 = vld [vmem:[%s1 + $0x28] sm:$0xff]
  %v518 = vld [vmem:[%s1 + $0x30] sm:$0xff]
  %v519 = vld [vmem:[%s1 + $0x38] sm:$0xff]
  %v520 = vld [vmem:[%s1 + $0x40] sm:$0xff]
  %v521 = vld [vmem:[%s1 + $0x48] sm:$0xff]
  %v522 = vld [vmem:[%s1 + $0x50] sm:$0xff]
  %v523 = vld [vmem:[%s1 + $0x58] sm:$0xff]
  %v524 = vld [vmem:[%s1 + $0x60] sm:$0xff]
  %v525 = vld [vmem:[%s1 + $0x68] sm:$0xff]
  %v526 = vld [vmem:[%s1 + $0x70] sm:$0xff]
  %v527 = vld [vmem:[%s1 + $0x78] sm:$0xff]
  %v528 = vld [vmem:[%s1 + $0x80] sm:$0xff]
  %v529 = vld [vmem:[%s1 + $0x88] sm:$0x33]
  %v530 = vld [vmem:[%s2] sm:$0x3]
  %v532 = vlaneseq
  %v533 = vshrl.u32 %v532, 7
  %v534 = vsub.s32 0, %v533
  %v535 = vrot.slane %v530, %v534
  %v536 = vlaneseq
  %v537 = vshrl.u32 %v536, 7
  %v538 = vsub.s32 1, %v537
  %v539 = vrot.slane %v530, %v538
  %v560 = vunpack.c.l.b16 %v512
  %v561 = vunpack.c.h.b16 %v512
  %v562 = vunpack.c.l.b16 %v513
  %v563 = vunpack.c.h.b16 %v513
  %v564 = vunpack.c.l.b16 %v514
  %v565 = vunpack.c.h.b16 %v514
  %v566 = vunpack.c.l.b16 %v515
  %v567 = vunpack.c.h.b16 %v515
  %v568 = vunpack.c.l.b16 %v516
  %v569 = vunpack.c.h.b16 %v516
  %v570 = vunpack.c.l.b16 %v517
  %v571 = vunpack.c.h.b16 %v517
  %v572 = vunpack.c.l.b16 %v518
  %v573 = vunpack.c.h.b16 %v518
  %v574 = vunpack.c.l.b16 %v519
  %v575 = vunpack.c.h.b16 %v519
  %v576 = vunpack.c.l.b16 %v520
  %v577 = vunpack.c.h.b16 %v520
  %v578 = vunpack.c.l.b16 %v521
  %v579 = vunpack.c.h.b16 %v521
  %v580 = vunpack.c.l.b16 %v522
  %v581 = vunpack.c.h.b16 %v522
  %v582 = vunpack.c.l.b16 %v523
  %v583 = vunpack.c.h.b16 %v523
  %v584 = vunpack.c.l.b16 %v524
  %v585 = vunpack.c.h.b16 %v524
  %v586 = vunpack.c.l.b16 %v525
  %v587 = vunpack.c.h.b16 %v525
  %v588 = vunpack.c.l.b16 %v526
  %v589 = vunpack.c.h.b16 %v526
  %v590 = vunpack.c.l.b16 %v527
  %v591 = vunpack.c.h.b16 %v527
  %v592 = vunpack.c.l.b16 %v528
  %v593 = vunpack.c.h.b16 %v528
  %v594 = vunpack.c.l.b16 %v529
  %v595 = vunpack.c.h.b16 %v529
  %v596 = vpack.c.b16 %v562, %v560
  %v597 = vpack.c.b16 %v563, %v561
  %v598 = vpack.c.b16 %v566, %v564
  %v599 = vpack.c.b16 %v567, %v565
  %v600 = vpack.c.b16 %v570, %v568
  %v601 = vpack.c.b16 %v571, %v569
  %v602 = vpack.c.b16 %v574, %v572
  %v603 = vpack.c.b16 %v575, %v573
  %v604 = vpack.c.b16 %v578, %v576
  %v605 = vpack.c.b16 %v579, %v577
  %v606 = vpack.c.b16 %v582, %v580
  %v607 = vpack.c.b16 %v583, %v581
  %v608 = vpack.c.b16 %v586, %v584
  %v609 = vpack.c.b16 %v587, %v585
  %v610 = vpack.c.b16 %v590, %v588
  %v611 = vpack.c.b16 %v591, %v589
  %v612 = vpack.c.b16 %v594, %v592
  %v613 = vpack.c.b16 %v595, %v593
  %vm630 = vcmask 97280
  %v632 = vsel %vm630, %v489, 0
  %v635 = vsel %vm630, %v491, 0
  %v638 = vsel %vm630, %v493, 0
  %v641 = vsel %vm630, %v495, 0
  %v644 = vsel %vm630, %v497, 0
  %v647 = vsel %vm630, %v499, 0
  %v650 = vsel %vm630, %v501, 0
  %v653 = vsel %vm630, %v503, 0
  %v656 = vsel %vm630, %v505, 0
  %v659 = vsel %vm630, %v507, 0
  %v662 = vsel %vm630, %v509, 0
  %v665 = vsel %vm630, %v511, 0
  %vm667 = vcmask 1045504
  %v669 = vsel %vm667, %v612, 0
  %v672 = vsel %vm667, %v613, 0
  %674 = vmatprep.subr.bf16.mxu0 %v611
  %675 = vmatpush1.bf16.msra.mxu0 %v610
  %676 = vmatprep.subr.bf16.mxu0 %v609
  %677 = vmatpush1.bf16.msra.mxu0 %v608
  %678 = vmatprep.subr.bf16.mxu0 %v607
  %679 = vmatpush1.bf16.msra.mxu0 %v606
  %680 = vmatprep.subr.bf16.mxu0 %v605
  %681 = vmatpush1.bf16.msra.mxu0 %v604
  %682 = vmatprep.subr.bf16.mxu0 %v603
  %683 = vmatpush1.bf16.msra.mxu0 %v602
  %684 = vmatprep.subr.bf16.mxu0 %v601
  %685 = vmatpush1.bf16.msra.mxu0 %v600
  %686 = vmatprep.subr.bf16.mxu0 %v599
  %687 = vmatpush1.bf16.msra.mxu0 %v598
  %688 = vmatprep.subr.bf16.mxu0 %v597
  %689 = vmatpush1.bf16.msra.mxu0 %v596
  %690 = vmatprep.subr.bf16.mxu0 0
  %691 = vmatpush2.bf16.msra.mxu0 0
  %692 = vmatprep.subr.bf16.mxu0 0
  %693 = vmatpush2.bf16.msra.mxu0 0
  %694 = vmatprep.subr.bf16.mxu0 0
  %695 = vmatpush2.bf16.msra.mxu0 0
  %696 = vmatprep.subr.bf16.mxu0 0
  %697 = vmatpush2.bf16.msra.mxu0 0
  %698 = vmatprep.subr.bf16.mxu0 0
  %699 = vmatpush2.bf16.msra.mxu0 0
  %700 = vmatprep.subr.bf16.mxu0 0
  %701 = vmatpush2.bf16.msra.mxu0 0
  %702 = vmatprep.subr.bf16.mxu0 0
  %703 = vmatpush2.bf16.msra.mxu0 0
  %704 = vmatprep.subr.bf16.mxu0 %v672
  %705 = vmatpush2.bf16.msra.mxu0 %v669
  %706 = vmatprep.mubr.bf16.mxu0 %v632
  %707 = vmatmul.mubr.bf16.gmra.mxu0 %v488
  %v708 = vpop.f32.mrf.mxu0
  %v709 = vadd.f32 %v535, %v708
  %v710 = vpop.f32.mrf.mxu0
  %v711 = vadd.f32 %v539, %v710
  %v712 = vpop.f32.mrf.mxu0
  %v713 = vadd.f32 %v535, %v712
  %v714 = vpop.f32.mrf.mxu0
  %v715 = vadd.f32 %v539, %v714
  %716 = vmatprep.mubr.bf16.mxu0 %v635
  %717 = vmatmul.mubr.bf16.gmra.mxu0 %v490
  %v718 = vpop.f32.mrf.mxu0
  %v719 = vadd.f32 %v535, %v718
  %v720 = vpop.f32.mrf.mxu0
  %v721 = vadd.f32 %v539, %v720
  %v722 = vpop.f32.mrf.mxu0
  %v723 = vadd.f32 %v535, %v722
  %v724 = vpop.f32.mrf.mxu0
  %v725 = vadd.f32 %v539, %v724
  %726 = vmatprep.mubr.bf16.mxu0 %v638
  %727 = vmatmul.mubr.bf16.gmra.mxu0 %v492
  %v728 = vpop.f32.mrf.mxu0
  %v729 = vadd.f32 %v535, %v728
  %v730 = vpop.f32.mrf.mxu0
  %v731 = vadd.f32 %v539, %v730
  %v732 = vpop.f32.mrf.mxu0
  %v733 = vadd.f32 %v535, %v732
  %v734 = vpop.f32.mrf.mxu0
  %v735 = vadd.f32 %v539, %v734
  %736 = vmatprep.mubr.bf16.mxu0 %v641
  %737 = vmatmul.mubr.bf16.gmra.mxu0 %v494
  %v738 = vpop.f32.mrf.mxu0
  %v739 = vadd.f32 %v535, %v738
  %v740 = vpop.f32.mrf.mxu0
  %v741 = vadd.f32 %v539, %v740
  %v742 = vpop.f32.mrf.mxu0
  %v743 = vadd.f32 %v535, %v742
  %v744 = vpop.f32.mrf.mxu0
  %v745 = vadd.f32 %v539, %v744
  %746 = vmatprep.mubr.bf16.mxu0 %v644
  %747 = vmatmul.mubr.bf16.gmra.mxu0 %v496
  %v748 = vpop.f32.mrf.mxu0
  %v749 = vadd.f32 %v535, %v748
  %v750 = vpop.f32.mrf.mxu0
  %v751 = vadd.f32 %v539, %v750
  %v752 = vpop.f32.mrf.mxu0
  %v753 = vadd.f32 %v535, %v752
  %v754 = vpop.f32.mrf.mxu0
  %v755 = vadd.f32 %v539, %v754
  %756 = vmatprep.mubr.bf16.mxu0 %v647
  %757 = vmatmul.mubr.bf16.gmra.mxu0 %v498
  %v758 = vpop.f32.mrf.mxu0
  %v759 = vadd.f32 %v535, %v758
  %v760 = vpop.f32.mrf.mxu0
  %v761 = vadd.f32 %v539, %v760
  %v762 = vpop.f32.mrf.mxu0
  %v763 = vadd.f32 %v535, %v762
  %v764 = vpop.f32.mrf.mxu0
  %v765 = vadd.f32 %v539, %v764
  %766 = vmatprep.mubr.bf16.mxu0 %v650
  %767 = vmatmul.mubr.bf16.gmra.mxu0 %v500
  %v768 = vpop.f32.mrf.mxu0
  %v769 = vadd.f32 %v535, %v768
  %v770 = vpop.f32.mrf.mxu0
  %v771 = vadd.f32 %v539, %v770
  %v772 = vpop.f32.mrf.mxu0
  %v773 = vadd.f32 %v535, %v772
  %v774 = vpop.f32.mrf.mxu0
  %v775 = vadd.f32 %v539, %v774
  %776 = vmatprep.mubr.bf16.mxu0 %v653
  %777 = vmatmul.mubr.bf16.gmra.mxu0 %v502
  %v778 = vpop.f32.mrf.mxu0
  %v779 = vadd.f32 %v535, %v778
  %v780 = vpop.f32.mrf.mxu0
  %v781 = vadd.f32 %v539, %v780
  %v782 = vpop.f32.mrf.mxu0
  %v783 = vadd.f32 %v535, %v782
  %v784 = vpop.f32.mrf.mxu0
  %v785 = vadd.f32 %v539, %v784
  %786 = vmatprep.mubr.bf16.mxu0 %v656
  %787 = vmatmul.mubr.bf16.gmra.mxu0 %v504
  %v788 = vpop.f32.mrf.mxu0
  %v789 = vadd.f32 %v535, %v788
  %v790 = vpop.f32.mrf.mxu0
  %v791 = vadd.f32 %v539, %v790
  %v792 = vpop.f32.mrf.mxu0
  %v793 = vadd.f32 %v535, %v792
  %v794 = vpop.f32.mrf.mxu0
  %v795 = vadd.f32 %v539, %v794
  %796 = vmatprep.mubr.bf16.mxu0 %v659
  %797 = vmatmul.mubr.bf16.gmra.mxu0 %v506
  %v798 = vpop.f32.mrf.mxu0
  %v799 = vadd.f32 %v535, %v798
  %v800 = vpop.f32.mrf.mxu0
  %v801 = vadd.f32 %v539, %v800
  %v802 = vpop.f32.mrf.mxu0
  %v803 = vadd.f32 %v535, %v802
  %v804 = vpop.f32.mrf.mxu0
  %v805 = vadd.f32 %v539, %v804
  %806 = vmatprep.mubr.bf16.mxu0 %v662
  %807 = vmatmul.mubr.bf16.gmra.mxu0 %v508
  %v808 = vpop.f32.mrf.mxu0
  %v809 = vadd.f32 %v535, %v808
  %v810 = vpop.f32.mrf.mxu0
  %v811 = vadd.f32 %v539, %v810
  %v812 = vpop.f32.mrf.mxu0
  %v813 = vadd.f32 %v535, %v812
  %v814 = vpop.f32.mrf.mxu0
  %v815 = vadd.f32 %v539, %v814
  %816 = vmatprep.mubr.bf16.mxu0 %v665
  %817 = vmatmul.mubr.bf16.gmra.mxu0 %v510
  %v818 = vpop.f32.mrf.mxu0
  %v819 = vadd.f32 %v535, %v818
  %v820 = vpop.f32.mrf.mxu0
  %v821 = vadd.f32 %v539, %v820
  %v822 = vpop.f32.mrf.mxu0
  %v823 = vadd.f32 %v535, %v822
  %v824 = vpop.f32.mrf.mxu0
  %v825 = vadd.f32 %v539, %v824
  %826 = vdwg.mxu0
  %v827 = vmax.f32 %v709, 0.0
  %v828 = vmax.f32 %v711, 0.0
  %v829 = vmax.f32 %v713, 0.0
  %v830 = vmax.f32 %v715, 0.0
  %v831 = vmax.f32 %v719, 0.0
  %v832 = vmax.f32 %v721, 0.0
  %v833 = vmax.f32 %v723, 0.0
  %v834 = vmax.f32 %v725, 0.0
  %v835 = vmax.f32 %v729, 0.0
  %v836 = vmax.f32 %v731, 0.0
  %v837 = vmax.f32 %v733, 0.0
  %v838 = vmax.f32 %v735, 0.0
  %v839 = vmax.f32 %v739, 0.0
  %v840 = vmax.f32 %v741, 0.0
  %v841 = vmax.f32 %v743, 0.0
  %v842 = vmax.f32 %v745, 0.0
  %v843 = vmax.f32 %v749, 0.0
  %v844 = vmax.f32 %v751, 0.0
  %v845 = vmax.f32 %v753, 0.0
  %v846 = vmax.f32 %v755, 0.0
  %v847 = vmax.f32 %v759, 0.0
  %v848 = vmax.f32 %v761, 0.0
  %v849 = vmax.f32 %v763, 0.0
  %v850 = vmax.f32 %v765, 0.0
  %v851 = vmax.f32 %v769, 0.0
  %v852 = vmax.f32 %v771, 0.0
  %v853 = vmax.f32 %v773, 0.0
  %v854 = vmax.f32 %v775, 0.0
  %v855 = vmax.f32 %v779, 0.0
  %v856 = vmax.f32 %v781, 0.0
  %v857 = vmax.f32 %v783, 0.0
  %v858 = vmax.f32 %v785, 0.0
  %v859 = vmax.f32 %v789, 0.0
  %v860 = vmax.f32 %v791, 0.0
  %v861 = vmax.f32 %v793, 0.0
  %v862 = vmax.f32 %v795, 0.0
  %v863 = vmax.f32 %v799, 0.0
  %v864 = vmax.f32 %v801, 0.0
  %v865 = vmax.f32 %v803, 0.0
  %v866 = vmax.f32 %v805, 0.0
  %v867 = vmax.f32 %v809, 0.0
  %v868 = vmax.f32 %v811, 0.0
  %v869 = vmax.f32 %v813, 0.0
  %v870 = vmax.f32 %v815, 0.0
  %v871 = vmax.f32 %v819, 0.0
  %v872 = vmax.f32 %v821, 0.0
  %v873 = vmax.f32 %v823, 0.0
  %v874 = vmax.f32 %v825, 0.0
  %v875 = vmax.f32 %v827, %v829
  %v876 = vmax.f32 %v828, %v830
  %v877 = vmax.f32 %v831, %v833
  %v878 = vmax.f32 %v832, %v834
  %v879 = vmax.f32 %v835, %v837
  %v880 = vmax.f32 %v836, %v838
  %v881 = vmax.f32 %v839, %v841
  %v882 = vmax.f32 %v840, %v842
  %v883 = vmax.f32 %v843, %v845
  %v884 = vmax.f32 %v844, %v846
  %v885 = vmax.f32 %v847, %v849
  %v886 = vmax.f32 %v848, %v850
  %v887 = vmax.f32 %v851, %v853
  %v888 = vmax.f32 %v852, %v854
  %v889 = vmax.f32 %v855, %v857
  %v890 = vmax.f32 %v856, %v858
  %v891 = vmax.f32 %v859, %v861
  %v892 = vmax.f32 %v860, %v862
  %v893 = vmax.f32 %v863, %v865
  %v894 = vmax.f32 %v864, %v866
  %v895 = vmax.f32 %v867, %v869
  %v896 = vmax.f32 %v868, %v870
  %v897 = vmax.f32 %v871, %v873
  %v898 = vmax.f32 %v872, %v874
  %923 = vrot.lane.b32.xlu0 %v875, 122
  %v924 = vpop.permute.xlu0 %923
  %925 = vrot.lane.b32.xlu0 %v876, 122
  %v926 = vpop.permute.xlu0 %925
  %927 = vrot.lane.b32.xlu0 %v877, 122
  %v928 = vpop.permute.xlu0 %927
  %929 = vrot.lane.b32.xlu0 %v878, 122
  %v930 = vpop.permute.xlu0 %929
  %931 = vrot.lane.b32.xlu0 %v879, 122
  %v932 = vpop.permute.xlu0 %931
  %933 = vrot.lane.b32.xlu0 %v880, 122
  %v934 = vpop.permute.xlu0 %933
  %935 = vrot.lane.b32.xlu0 %v881, 122
  %v936 = vpop.permute.xlu0 %935
  %937 = vrot.lane.b32.xlu0 %v882, 122
  %v938 = vpop.permute.xlu0 %937
  %939 = vrot.lane.b32.xlu0 %v883, 122
  %v940 = vpop.permute.xlu0 %939
  %941 = vrot.lane.b32.xlu0 %v884, 122
  %v942 = vpop.permute.xlu0 %941
  %943 = vrot.lane.b32.xlu0 %v885, 122
  %v944 = vpop.permute.xlu0 %943
  %945 = vrot.lane.b32.xlu0 %v886, 122
  %v946 = vpop.permute.xlu0 %945
  %947 = vrot.lane.b32.xlu0 %v887, 122
  %v948 = vpop.permute.xlu0 %947
  %949 = vrot.lane.b32.xlu0 %v888, 122
  %v950 = vpop.permute.xlu0 %949
  %951 = vrot.lane.b32.xlu0 %v889, 122
  %v952 = vpop.permute.xlu0 %951
  %953 = vrot.lane.b32.xlu0 %v890, 122
  %v954 = vpop.permute.xlu0 %953
  %955 = vrot.lane.b32.xlu0 %v891, 122
  %v956 = vpop.permute.xlu0 %955
  %957 = vrot.lane.b32.xlu0 %v892, 122
  %v958 = vpop.permute.xlu0 %957
  %959 = vrot.lane.b32.xlu0 %v893, 122
  %v960 = vpop.permute.xlu0 %959
  %961 = vrot.lane.b32.xlu0 %v894, 122
  %v962 = vpop.permute.xlu0 %961
  %963 = vrot.lane.b32.xlu0 %v895, 122
  %v964 = vpop.permute.xlu0 %963
  %965 = vrot.lane.b32.xlu0 %v896, 122
  %v966 = vpop.permute.xlu0 %965
  %967 = vrot.lane.b32.xlu0 %v897, 122
  %v968 = vpop.permute.xlu0 %967
  %969 = vrot.lane.b32.xlu0 %v898, 122
  %v970 = vpop.permute.xlu0 %969
  %vm971 = vcmask 998400
  %v972 = vsel %vm971, %v924, %v926
  %v973 = vsel %vm971, %v928, %v930
  %v974 = vsel %vm971, %v932, %v934
  %v975 = vsel %vm971, %v936, %v938
  %v976 = vsel %vm971, %v940, %v942
  %v977 = vsel %vm971, %v944, %v946
  %v978 = vsel %vm971, %v948, %v950
  %v979 = vsel %vm971, %v952, %v954
  %v980 = vsel %vm971, %v956, %v958
  %v981 = vsel %vm971, %v960, %v962
  %v982 = vsel %vm971, %v964, %v966
  %v983 = vsel %vm971, %v968, %v970
  %v1008 = vmax.f32 %v875, %v972
  %v1009 = vmax.f32 %v876, %v926
  %v1010 = vmax.f32 %v877, %v973
  %v1011 = vmax.f32 %v878, %v930
  %v1012 = vmax.f32 %v879, %v974
  %v1013 = vmax.f32 %v880, %v934
  %v1014 = vmax.f32 %v881, %v975
  %v1015 = vmax.f32 %v882, %v938
  %v1016 = vmax.f32 %v883, %v976
  %v1017 = vmax.f32 %v884, %v942
  %v1018 = vmax.f32 %v885, %v977
  %v1019 = vmax.f32 %v886, %v946
  %v1020 = vmax.f32 %v887, %v978
  %v1021 = vmax.f32 %v888, %v950
  %v1022 = vmax.f32 %v889, %v979
  %v1023 = vmax.f32 %v890, %v954
  %v1024 = vmax.f32 %v891, %v980
  %v1025 = vmax.f32 %v892, %v958
  %v1026 = vmax.f32 %v893, %v981
  %v1027 = vmax.f32 %v894, %v962
  %v1028 = vmax.f32 %v895, %v982
  %v1029 = vmax.f32 %v896, %v966
  %v1030 = vmax.f32 %v897, %v983
  %v1031 = vmax.f32 %v898, %v970
  %v1032 = vpack.c.bf16 %v1010, %v1008
  %v1033 = vpack.c.bf16 %v1011, %v1009
  %v1034 = vpack.c.bf16 %v1014, %v1012
  %v1035 = vpack.c.bf16 %v1015, %v1013
  %v1036 = vpack.c.bf16 %v1018, %v1016
  %v1037 = vpack.c.bf16 %v1019, %v1017
  %v1038 = vpack.c.bf16 %v1022, %v1020
  %v1039 = vpack.c.bf16 %v1023, %v1021
  %v1040 = vpack.c.bf16 %v1026, %v1024
  %v1041 = vpack.c.bf16 %v1027, %v1025
  %v1042 = vpack.c.bf16 %v1030, %v1028
  %v1043 = vpack.c.bf16 %v1031, %v1029
  %v1044 = vld [vmem:[%s3] sm:$0xf]
  %v1045 = vld [vmem:[%s3 + $0x4] sm:$0xf]
  %v1046 = vld [vmem:[%s3 + $0x8] sm:$0xf]
  %v1047 = vld [vmem:[%s3 + $0xc] sm:$0xf]
  %v1048 = vld [vmem:[%s3 + $0x10] sm:$0xf]
  %v1049 = vld [vmem:[%s3 + $0x14] sm:$0xf]
  %v1050 = vld [vmem:[%s3 + $0x18] sm:$0xf]
  %v1051 = vld [vmem:[%s3 + $0x1c] sm:$0xf]
  %v1052 = vld [vmem:[%s3 + $0x20] sm:$0xf]
  %v1053 = vld [vmem:[%s3 + $0x24] sm:$0xf]
  %v1054 = vld [vmem:[%s3 + $0x28] sm:$0xf]
  %v1055 = vld [vmem:[%s3 + $0x2c] sm:$0xf]
  %v1056 = vld [vmem:[%s3 + $0x30] sm:$0xf]
  %v1057 = vld [vmem:[%s3 + $0x34] sm:$0xf]
  %v1058 = vld [vmem:[%s3 + $0x38] sm:$0xf]
  %v1059 = vld [vmem:[%s3 + $0x3c] sm:$0xf]
  %v1060 = vld [vmem:[%s3 + $0x40] sm:$0xf]
  %v1061 = vld [vmem:[%s3 + $0x44] sm:$0x1]
  %v1080 = vunpack.c.l.b16 %v1044
  %v1081 = vunpack.c.l.b16 %v1045
  %v1082 = vunpack.c.l.b16 %v1046
  %v1083 = vunpack.c.l.b16 %v1047
  %v1084 = vunpack.c.l.b16 %v1048
  %v1085 = vunpack.c.l.b16 %v1049
  %v1086 = vunpack.c.l.b16 %v1050
  %v1087 = vunpack.c.l.b16 %v1051
  %v1088 = vunpack.c.l.b16 %v1052
  %v1089 = vunpack.c.l.b16 %v1053
  %v1090 = vunpack.c.l.b16 %v1054
  %v1091 = vunpack.c.l.b16 %v1055
  %v1092 = vunpack.c.l.b16 %v1056
  %v1093 = vunpack.c.l.b16 %v1057
  %v1094 = vunpack.c.l.b16 %v1058
  %v1095 = vunpack.c.l.b16 %v1059
  %v1096 = vunpack.c.l.b16 %v1060
  %v1097 = vunpack.c.l.b16 %v1061
  %v1098 = vpack.c.b16 %v1081, %v1080
  %v1099 = vpack.c.b16 %v1083, %v1082
  %v1100 = vpack.c.b16 %v1085, %v1084
  %v1101 = vpack.c.b16 %v1087, %v1086
  %v1102 = vpack.c.b16 %v1089, %v1088
  %v1103 = vpack.c.b16 %v1091, %v1090
  %v1104 = vpack.c.b16 %v1093, %v1092
  %v1105 = vpack.c.b16 %v1095, %v1094
  %v1106 = vpack.c.b16 %v1097, %v1096
  %vm1115 = vcmask 80896
  %v1117 = vsel %vm1115, %v1033, 0
  %v1120 = vsel %vm1115, %v1035, 0
  %v1123 = vsel %vm1115, %v1037, 0
  %v1126 = vsel %vm1115, %v1039, 0
  %v1129 = vsel %vm1115, %v1041, 0
  %v1132 = vsel %vm1115, %v1043, 0
  %vm1134 = vcmask 1044480
  %v1136 = vsel %vm1134, %v1106, 0
  %1138 = vmatprep.subr.bf16.mxu0 0
  %1139 = vmatpush1.bf16.msra.mxu0 %v1105
  %1140 = vmatprep.subr.bf16.mxu0 0
  %1141 = vmatpush1.bf16.msra.mxu0 %v1104
  %1142 = vmatprep.subr.bf16.mxu0 0
  %1143 = vmatpush1.bf16.msra.mxu0 %v1103
  %1144 = vmatprep.subr.bf16.mxu0 0
  %1145 = vmatpush1.bf16.msra.mxu0 %v1102
  %1146 = vmatprep.subr.bf16.mxu0 0
  %1147 = vmatpush1.bf16.msra.mxu0 %v1101
  %1148 = vmatprep.subr.bf16.mxu0 0
  %1149 = vmatpush1.bf16.msra.mxu0 %v1100
  %1150 = vmatprep.subr.bf16.mxu0 0
  %1151 = vmatpush1.bf16.msra.mxu0 %v1099
  %1152 = vmatprep.subr.bf16.mxu0 0
  %1153 = vmatpush1.bf16.msra.mxu0 %v1098
  %1154 = vmatprep.subr.bf16.mxu0 0
  %1155 = vmatpush2.bf16.msra.mxu0 0
  %1156 = vmatprep.subr.bf16.mxu0 0
  %1157 = vmatpush2.bf16.msra.mxu0 0
  %1158 = vmatprep.subr.bf16.mxu0 0
  %1159 = vmatpush2.bf16.msra.mxu0 0
  %1160 = vmatprep.subr.bf16.mxu0 0
  %1161 = vmatpush2.bf16.msra.mxu0 0
  %1162 = vmatprep.subr.bf16.mxu0 0
  %1163 = vmatpush2.bf16.msra.mxu0 0
  %1164 = vmatprep.subr.bf16.mxu0 0
  %1165 = vmatpush2.bf16.msra.mxu0 0
  %1166 = vmatprep.subr.bf16.mxu0 0
  %1167 = vmatpush2.bf16.msra.mxu0 0
  %1168 = vmatprep.subr.bf16.mxu0 0
  %1169 = vmatpush2.bf16.msra.mxu0 %v1136
  %1170 = vmatprep.mubr.bf16.mxu0 %v1117
  %1171 = vmatmul.mubr.bf16.gmra.mxu0 %v1032
  %v1172 = vpop.f32.mrf.mxu0
  %v1173 = vadd.f32 0.0, %v1172
  %v1174 = vpop.f32.mrf.mxu0
  %v1175 = vpop.f32.mrf.mxu0
  %v1176 = vadd.f32 0.0, %v1175
  %v1177 = vpop.f32.mrf.mxu0
  %1178 = vmatprep.mubr.bf16.mxu0 %v1120
  %1179 = vmatmul.mubr.bf16.gmra.mxu0 %v1034
  %v1180 = vpop.f32.mrf.mxu0
  %v1181 = vadd.f32 0.0, %v1180
  %v1182 = vpop.f32.mrf.mxu0
  %v1183 = vpop.f32.mrf.mxu0
  %v1184 = vadd.f32 0.0, %v1183
  %v1185 = vpop.f32.mrf.mxu0
  %1186 = vmatprep.mubr.bf16.mxu0 %v1123
  %1187 = vmatmul.mubr.bf16.gmra.mxu0 %v1036
  %v1188 = vpop.f32.mrf.mxu0
  %v1189 = vadd.f32 0.0, %v1188
  %v1190 = vpop.f32.mrf.mxu0
  %v1191 = vpop.f32.mrf.mxu0
  %v1192 = vadd.f32 0.0, %v1191
  %v1193 = vpop.f32.mrf.mxu0
  %1194 = vmatprep.mubr.bf16.mxu0 %v1126
  %1195 = vmatmul.mubr.bf16.gmra.mxu0 %v1038
  %v1196 = vpop.f32.mrf.mxu0
  %v1197 = vadd.f32 0.0, %v1196
  %v1198 = vpop.f32.mrf.mxu0
  %v1199 = vpop.f32.mrf.mxu0
  %v1200 = vadd.f32 0.0, %v1199
  %v1201 = vpop.f32.mrf.mxu0
  %1202 = vmatprep.mubr.bf16.mxu0 %v1129
  %1203 = vmatmul.mubr.bf16.gmra.mxu0 %v1040
  %v1204 = vpop.f32.mrf.mxu0
  %v1205 = vadd.f32 0.0, %v1204
  %v1206 = vpop.f32.mrf.mxu0
  %v1207 = vpop.f32.mrf.mxu0
  %v1208 = vadd.f32 0.0, %v1207
  %v1209 = vpop.f32.mrf.mxu0
  %1210 = vmatprep.mubr.bf16.mxu0 %v1132
  %1211 = vmatmul.mubr.bf16.gmra.mxu0 %v1042
  %v1212 = vpop.f32.mrf.mxu0
  %v1213 = vadd.f32 0.0, %v1212
  %v1214 = vpop.f32.mrf.mxu0
  %v1215 = vpop.f32.mrf.mxu0
  %v1216 = vadd.f32 0.0, %v1215
  %v1217 = vpop.f32.mrf.mxu0
  %1218 = vdwg.mxu0
  %1227 = vrot.lane.b32.xlu0 %v1176, 72
  %v1228 = vpop.permute.xlu0 %1227
  %1229 = vrot.lane.b32.xlu0 %v1181, 72
  %v1230 = vpop.permute.xlu0 %1229
  %1231 = vrot.lane.b32.xlu0 %v1184, 72
  %v1232 = vpop.permute.xlu0 %1231
  %1233 = vrot.lane.b32.xlu0 %v1189, 72
  %v1234 = vpop.permute.xlu0 %1233
  %1235 = vrot.lane.b32.xlu0 %v1192, 72
  %v1236 = vpop.permute.xlu0 %1235
  %1237 = vrot.lane.b32.xlu0 %v1197, 72
  %v1238 = vpop.permute.xlu0 %1237
  %1239 = vrot.lane.b32.xlu0 %v1200, 72
  %v1240 = vpop.permute.xlu0 %1239
  %1241 = vrot.lane.b32.xlu0 %v1205, 72
  %v1242 = vpop.permute.xlu0 %1241
  %1252 = vrot.lane.b32.xlu0 %v1181, 16
  %v1253 = vpop.permute.xlu0 %1252
  %1254 = vrot.lane.b32.xlu0 %v1184, 16
  %v1255 = vpop.permute.xlu0 %1254
  %1256 = vrot.lane.b32.xlu0 %v1189, 16
  %v1257 = vpop.permute.xlu0 %1256
  %1258 = vrot.lane.b32.xlu0 %v1192, 16
  %v1259 = vpop.permute.xlu0 %1258
  %1260 = vrot.lane.b32.xlu0 %v1197, 16
  %v1261 = vpop.permute.xlu0 %1260
  %1262 = vrot.lane.b32.xlu0 %v1200, 16
  %v1263 = vpop.permute.xlu0 %1262
  %1264 = vrot.lane.b32.xlu0 %v1205, 16
  %v1265 = vpop.permute.xlu0 %1264
  %1266 = vrot.lane.b32.xlu0 %v1208, 16
  %v1267 = vpop.permute.xlu0 %1266
  %1277 = vrot.lane.b32.xlu0 %v1184, 88
  %v1278 = vpop.permute.xlu0 %1277
  %1279 = vrot.lane.b32.xlu0 %v1189, 88
  %v1280 = vpop.permute.xlu0 %1279
  %1281 = vrot.lane.b32.xlu0 %v1192, 88
  %v1282 = vpop.permute.xlu0 %1281
  %1283 = vrot.lane.b32.xlu0 %v1197, 88
  %v1284 = vpop.permute.xlu0 %1283
  %1285 = vrot.lane.b32.xlu0 %v1200, 88
  %v1286 = vpop.permute.xlu0 %1285
  %1287 = vrot.lane.b32.xlu0 %v1205, 88
  %v1288 = vpop.permute.xlu0 %1287
  %1289 = vrot.lane.b32.xlu0 %v1208, 88
  %v1290 = vpop.permute.xlu0 %1289
  %1291 = vrot.lane.b32.xlu0 %v1213, 88
  %v1292 = vpop.permute.xlu0 %1291
  %1302 = vrot.lane.b32.xlu0 %v1189, 32
  %v1303 = vpop.permute.xlu0 %1302
  %1304 = vrot.lane.b32.xlu0 %v1192, 32
  %v1305 = vpop.permute.xlu0 %1304
  %1306 = vrot.lane.b32.xlu0 %v1197, 32
  %v1307 = vpop.permute.xlu0 %1306
  %1308 = vrot.lane.b32.xlu0 %v1200, 32
  %v1309 = vpop.permute.xlu0 %1308
  %1310 = vrot.lane.b32.xlu0 %v1205, 32
  %v1311 = vpop.permute.xlu0 %1310
  %1312 = vrot.lane.b32.xlu0 %v1208, 32
  %v1313 = vpop.permute.xlu0 %1312
  %1314 = vrot.lane.b32.xlu0 %v1213, 32
  %v1315 = vpop.permute.xlu0 %1314
  %1316 = vrot.lane.b32.xlu0 %v1216, 32
  %v1317 = vpop.permute.xlu0 %1316
  %vm1326 = vcmask 588800
  %v1327 = vsel %vm1326, %v1173, %v1228
  %v1328 = vsel %vm1326, %v1176, %v1230
  %v1329 = vsel %vm1326, %v1181, %v1232
  %v1330 = vsel %vm1326, %v1184, %v1234
  %v1331 = vsel %vm1326, %v1189, %v1236
  %v1332 = vsel %vm1326, %v1192, %v1238
  %v1333 = vsel %vm1326, %v1197, %v1240
  %v1334 = vsel %vm1326, %v1200, %v1242
  %vm1335 = vcmask 130048
  %v1336 = vsel %vm1335, %v1228, %v1253
  %v1337 = vsel %vm1335, %v1230, %v1255
  %v1338 = vsel %vm1335, %v1232, %v1257
  %v1339 = vsel %vm1335, %v1234, %v1259
  %v1340 = vsel %vm1335, %v1236, %v1261
  %v1341 = vsel %vm1335, %v1238, %v1263
  %v1342 = vsel %vm1335, %v1240, %v1265
  %v1343 = vsel %vm1335, %v1242, %v1267
  %vm1344 = vcmask 719872
  %v1345 = vsel %vm1344, %v1336, %v1278
  %v1346 = vsel %vm1344, %v1337, %v1280
  %v1347 = vsel %vm1344, %v1338, %v1282
  %v1348 = vsel %vm1344, %v1339, %v1284
  %v1349 = vsel %vm1344, %v1340, %v1286
  %v1350 = vsel %vm1344, %v1341, %v1288
  %v1351 = vsel %vm1344, %v1342, %v1290
  %v1352 = vsel %vm1344, %v1343, %v1292
  %vm1353 = vcmask 261120
  %v1354 = vsel %vm1353, %v1278, %v1303
  %v1355 = vsel %vm1353, %v1280, %v1305
  %v1356 = vsel %vm1353, %v1282, %v1307
  %v1357 = vsel %vm1353, %v1284, %v1309
  %v1358 = vsel %vm1353, %v1286, %v1311
  %v1359 = vsel %vm1353, %v1288, %v1313
  %v1360 = vsel %vm1353, %v1290, %v1315
  %v1361 = vsel %vm1353, %v1292, %v1317
  %v1362 = vpack.c.bf16 %v1328, %v1327
  %v1363 = vpack.c.bf16 %v1346, %v1345
  %v1364 = vpack.c.bf16 %v1355, %v1354
  %v1365 = vpack.c.bf16 %v1330, %v1329
  %v1366 = vpack.c.bf16 %v1348, %v1347
  %v1367 = vpack.c.bf16 %v1357, %v1356
  %v1368 = vpack.c.bf16 %v1332, %v1331
  %v1369 = vpack.c.bf16 %v1350, %v1349
  %v1370 = vpack.c.bf16 %v1359, %v1358
  %v1371 = vpack.c.bf16 %v1334, %v1333
  %v1372 = vpack.c.bf16 %v1352, %v1351
  %v1373 = vpack.c.bf16 %v1361, %v1360
  %v1374 = vld [vmem:[%s4] sm:$0xf]
  %v1375 = vld [vmem:[%s4 + $0x4] sm:$0xf]
  %v1376 = vld [vmem:[%s4 + $0x8] sm:$0xf]
  %v1377 = vld [vmem:[%s4 + $0xc] sm:$0xf]
  %v1378 = vld [vmem:[%s4 + $0x10] sm:$0xf]
  %v1379 = vld [vmem:[%s4 + $0x14] sm:$0xf]
  %v1380 = vld [vmem:[%s4 + $0x18] sm:$0xf]
  %v1381 = vld [vmem:[%s4 + $0x1c] sm:$0xf]
  %v1382 = vld [vmem:[%s4 + $0x20] sm:$0xf]
  %v1383 = vld [vmem:[%s4 + $0x24] sm:$0xf]
  %v1384 = vld [vmem:[%s4 + $0x28] sm:$0xf]
  %v1385 = vld [vmem:[%s4 + $0x2c] sm:$0xf]
  %v1386 = vld [vmem:[%s4 + $0x30] sm:$0xf]
  %v1387 = vld [vmem:[%s4 + $0x34] sm:$0xf]
  %v1388 = vld [vmem:[%s4 + $0x38] sm:$0xf]
  %v1389 = vld [vmem:[%s4 + $0x3c] sm:$0xf]
  %v1390 = vld [vmem:[%s4 + $0x40] sm:$0xf]
  %v1391 = vld [vmem:[%s4 + $0x44] sm:$0xf]
  %v1392 = vld [vmem:[%s4 + $0x48] sm:$0xf]
  %v1393 = vld [vmem:[%s4 + $0x4c] sm:$0xf]
  %v1394 = vld [vmem:[%s4 + $0x50] sm:$0xf]
  %v1395 = vld [vmem:[%s4 + $0x54] sm:$0xf]
  %v1396 = vld [vmem:[%s4 + $0x58] sm:$0xf]
  %v1397 = vld [vmem:[%s4 + $0x5c] sm:$0xf]
  %v1398 = vld [vmem:[%s4 + $0x60] sm:$0xf]
  %v1399 = vld [vmem:[%s4 + $0x64] sm:$0xf]
  %v1400 = vld [vmem:[%s4 + $0x68] sm:$0xf]
  %v1401 = vld [vmem:[%s4 + $0x6c] sm:$0xf]
  %v1402 = vld [vmem:[%s4 + $0x70] sm:$0xf]
  %v1403 = vld [vmem:[%s4 + $0x74] sm:$0xf]
  %v1404 = vld [vmem:[%s4 + $0x78] sm:$0xf]
  %v1405 = vld [vmem:[%s4 + $0x7c] sm:$0xf]
  %v1406 = vld [vmem:[%s4 + $0x80] sm:$0xf]
  %v1407 = vld [vmem:[%s4 + $0x84] sm:$0xf]
  %v1408 = vld [vmem:[%s4 + $0x88] sm:$0xf]
  %v1409 = vld [vmem:[%s4 + $0x8c] sm:$0xf]
  %v1410 = vld [vmem:[%s4 + $0x90] sm:$0xf]
  %v1411 = vld [vmem:[%s4 + $0x94] sm:$0xf]
  %v1412 = vld [vmem:[%s4 + $0x98] sm:$0xf]
  %v1413 = vld [vmem:[%s4 + $0x9c] sm:$0xf]
  %v1414 = vld [vmem:[%s4 + $0xa0] sm:$0xf]
  %v1415 = vld [vmem:[%s4 + $0xa4] sm:$0xf]
  %v1416 = vld [vmem:[%s4 + $0xa8] sm:$0xf]
  %v1417 = vld [vmem:[%s4 + $0xac] sm:$0xf]
  %v1418 = vld [vmem:[%s4 + $0xb0] sm:$0xf]
  %v1419 = vld [vmem:[%s5] sm:$0x1]
  %v1421 = vlaneseq
  %v1422 = vshrl.u32 %v1421, 7
  %v1423 = vsub.s32 0, %v1422
  %v1424 = vrot.slane %v1419, %v1423
  %v1471 = vunpack.c.l.b16 %v1374
  %v1472 = vunpack.c.l.b16 %v1375
  %v1473 = vunpack.c.l.b16 %v1376
  %v1474 = vunpack.c.l.b16 %v1377
  %v1475 = vunpack.c.l.b16 %v1378
  %v1476 = vunpack.c.l.b16 %v1379
  %v1477 = vunpack.c.l.b16 %v1380
  %v1478 = vunpack.c.l.b16 %v1381
  %v1479 = vunpack.c.l.b16 %v1382
  %v1480 = vunpack.c.l.b16 %v1383
  %v1481 = vunpack.c.l.b16 %v1384
  %v1482 = vunpack.c.l.b16 %v1385
  %v1483 = vunpack.c.l.b16 %v1386
  %v1484 = vunpack.c.l.b16 %v1387
  %v1485 = vunpack.c.l.b16 %v1388
  %v1486 = vunpack.c.l.b16 %v1389
  %v1487 = vunpack.c.l.b16 %v1390
  %v1488 = vunpack.c.l.b16 %v1391
  %v1489 = vunpack.c.l.b16 %v1392
  %v1490 = vunpack.c.l.b16 %v1393
  %v1491 = vunpack.c.l.b16 %v1394
  %v1492 = vunpack.c.l.b16 %v1395
  %v1493 = vunpack.c.l.b16 %v1396
  %v1494 = vunpack.c.l.b16 %v1397
  %v1495 = vunpack.c.l.b16 %v1398
  %v1496 = vunpack.c.l.b16 %v1399
  %v1497 = vunpack.c.l.b16 %v1400
  %v1498 = vunpack.c.l.b16 %v1401
  %v1499 = vunpack.c.l.b16 %v1402
  %v1500 = vunpack.c.l.b16 %v1403
  %v1501 = vunpack.c.l.b16 %v1404
  %v1502 = vunpack.c.l.b16 %v1405
  %v1503 = vunpack.c.l.b16 %v1406
  %v1504 = vunpack.c.l.b16 %v1407
  %v1505 = vunpack.c.l.b16 %v1408
  %v1506 = vunpack.c.l.b16 %v1409
  %v1507 = vunpack.c.l.b16 %v1410
  %v1508 = vunpack.c.l.b16 %v1411
  %v1509 = vunpack.c.l.b16 %v1412
  %v1510 = vunpack.c.l.b16 %v1413
  %v1511 = vunpack.c.l.b16 %v1414
  %v1512 = vunpack.c.l.b16 %v1415
  %v1513 = vunpack.c.l.b16 %v1416
  %v1514 = vunpack.c.l.b16 %v1417
  %v1515 = vunpack.c.l.b16 %v1418
  %v1516 = vpack.c.b16 %v1472, %v1471
  %v1517 = vpack.c.b16 %v1474, %v1473
  %v1518 = vpack.c.b16 %v1476, %v1475
  %v1519 = vpack.c.b16 %v1478, %v1477
  %v1520 = vpack.c.b16 %v1480, %v1479
  %v1521 = vpack.c.b16 %v1482, %v1481
  %v1522 = vpack.c.b16 %v1484, %v1483
  %v1523 = vpack.c.b16 %v1486, %v1485
  %v1524 = vpack.c.b16 %v1488, %v1487
  %v1525 = vpack.c.b16 %v1490, %v1489
  %v1526 = vpack.c.b16 %v1492, %v1491
  %v1527 = vpack.c.b16 %v1494, %v1493
  %v1528 = vpack.c.b16 %v1496, %v1495
  %v1529 = vpack.c.b16 %v1498, %v1497
  %v1530 = vpack.c.b16 %v1500, %v1499
  %v1531 = vpack.c.b16 %v1502, %v1501
  %v1532 = vpack.c.b16 %v1504, %v1503
  %v1533 = vpack.c.b16 %v1506, %v1505
  %v1534 = vpack.c.b16 %v1508, %v1507
  %v1535 = vpack.c.b16 %v1510, %v1509
  %v1536 = vpack.c.b16 %v1512, %v1511
  %v1537 = vpack.c.b16 %v1514, %v1513
  %v1538 = vpack.c.b16 %v1515, %v1515
  %vm1561 = vcmask 850944
  %v1563 = vsel %vm1561, %v1364, 0
  %v1566 = vsel %vm1561, %v1367, 0
  %v1569 = vsel %vm1561, %v1370, 0
  %v1572 = vsel %vm1561, %v1373, 0
  %vm1574 = vcmask 1043456
  %v1576 = vsel %vm1574, %v1538, 0
  %1578 = vmatprep.subr.bf16.mxu0 0
  %1579 = vmatpush1.bf16.msra.mxu0 %v1523
  %1580 = vmatprep.subr.bf16.mxu0 0
  %1581 = vmatpush1.bf16.msra.mxu0 %v1522
  %1582 = vmatprep.subr.bf16.mxu0 0
  %1583 = vmatpush1.bf16.msra.mxu0 %v1521
  %1584 = vmatprep.subr.bf16.mxu0 0
  %1585 = vmatpush1.bf16.msra.mxu0 %v1520
  %1586 = vmatprep.subr.bf16.mxu0 0
  %1587 = vmatpush1.bf16.msra.mxu0 %v1519
  %1588 = vmatprep.subr.bf16.mxu0 0
  %1589 = vmatpush1.bf16.msra.mxu0 %v1518
  %1590 = vmatprep.subr.bf16.mxu0 0
  %1591 = vmatpush1.bf16.msra.mxu0 %v1517
  %1592 = vmatprep.subr.bf16.mxu0 0
  %1593 = vmatpush1.bf16.msra.mxu0 %v1516
  %1594 = vmatprep.subr.bf16.mxu0 0
  %1595 = vmatpush2.bf16.msra.mxu0 %v1531
  %1596 = vmatprep.subr.bf16.mxu0 0
  %1597 = vmatpush2.bf16.msra.mxu0 %v1530
  %1598 = vmatprep.subr.bf16.mxu0 0
  %1599 = vmatpush2.bf16.msra.mxu0 %v1529
  %1600 = vmatprep.subr.bf16.mxu0 0
  %1601 = vmatpush2.bf16.msra.mxu0 %v1528
  %1602 = vmatprep.subr.bf16.mxu0 0
  %1603 = vmatpush2.bf16.msra.mxu0 %v1527
  %1604 = vmatprep.subr.bf16.mxu0 0
  %1605 = vmatpush2.bf16.msra.mxu0 %v1526
  %1606 = vmatprep.subr.bf16.mxu0 0
  %1607 = vmatpush2.bf16.msra.mxu0 %v1525
  %1608 = vmatprep.subr.bf16.mxu0 0
  %1609 = vmatpush2.bf16.msra.mxu0 %v1524
  %1610 = vmatprep.mubr.bf16.mxu0 %v1363
  %1611 = vmatmul.mubr.bf16.gmra.mxu0 %v1362
  %v1612 = vpop.f32.mrf.mxu0
  %v1613 = vadd.f32 %v1424, %v1612
  %v1614 = vpop.f32.mrf.mxu0
  %v1615 = vpop.f32.mrf.mxu0
  %v1616 = vadd.f32 %v1424, %v1615
  %v1617 = vpop.f32.mrf.mxu0
  %1618 = vmatprep.mubr.bf16.mxu0 %v1366
  %1619 = vmatmul.mubr.bf16.gmra.mxu0 %v1365
  %v1620 = vpop.f32.mrf.mxu0
  %v1621 = vadd.f32 %v1424, %v1620
  %v1622 = vpop.f32.mrf.mxu0
  %v1623 = vpop.f32.mrf.mxu0
  %v1624 = vadd.f32 %v1424, %v1623
  %v1625 = vpop.f32.mrf.mxu0
  %1626 = vmatprep.mubr.bf16.mxu0 %v1369
  %1627 = vmatmul.mubr.bf16.gmra.mxu0 %v1368
  %v1628 = vpop.f32.mrf.mxu0
  %v1629 = vadd.f32 %v1424, %v1628
  %v1630 = vpop.f32.mrf.mxu0
  %v1631 = vpop.f32.mrf.mxu0
  %v1632 = vadd.f32 %v1424, %v1631
  %v1633 = vpop.f32.mrf.mxu0
  %1634 = vmatprep.mubr.bf16.mxu0 %v1372
  %1635 = vmatmul.mubr.bf16.gmra.mxu0 %v1371
  %v1636 = vpop.f32.mrf.mxu0
  %v1637 = vadd.f32 %v1424, %v1636
  %v1638 = vpop.f32.mrf.mxu0
  %v1639 = vpop.f32.mrf.mxu0
  %v1640 = vadd.f32 %v1424, %v1639
  %v1641 = vpop.f32.mrf.mxu0
  %1642 = vdwg.mxu0
  %1643 = vmatprep.subr.bf16.mxu0 0
  %1644 = vmatpush1.bf16.msra.mxu0 0
  %1645 = vmatprep.subr.bf16.mxu0 0
  %1646 = vmatpush1.bf16.msra.mxu0 %v1576
  %1647 = vmatprep.subr.bf16.mxu0 0
  %1648 = vmatpush1.bf16.msra.mxu0 %v1537
  %1649 = vmatprep.subr.bf16.mxu0 0
  %1650 = vmatpush1.bf16.msra.mxu0 %v1536
  %1651 = vmatprep.subr.bf16.mxu0 0
  %1652 = vmatpush1.bf16.msra.mxu0 %v1535
  %1653 = vmatprep.subr.bf16.mxu0 0
  %1654 = vmatpush1.bf16.msra.mxu0 %v1534
  %1655 = vmatprep.subr.bf16.mxu0 0
  %1656 = vmatpush1.bf16.msra.mxu0 %v1533
  %1657 = vmatprep.subr.bf16.mxu0 0
  %1658 = vmatpush1.bf16.msra.mxu0 %v1532
  %1659 = vmatprep.subr.bf16.mxu0 0
  %1660 = vmatpush2.bf16.msra.mxu0 0
  %1661 = vmatprep.subr.bf16.mxu0 0
  %1662 = vmatpush2.bf16.msra.mxu0 0
  %1663 = vmatprep.subr.bf16.mxu0 0
  %1664 = vmatpush2.bf16.msra.mxu0 0
  %1665 = vmatprep.subr.bf16.mxu0 0
  %1666 = vmatpush2.bf16.msra.mxu0 0
  %1667 = vmatprep.subr.bf16.mxu0 0
  %1668 = vmatpush2.bf16.msra.mxu0 0
  %1669 = vmatprep.subr.bf16.mxu0 0
  %1670 = vmatpush2.bf16.msra.mxu0 0
  %1671 = vmatprep.subr.bf16.mxu0 0
  %1672 = vmatpush2.bf16.msra.mxu0 0
  %1673 = vmatprep.subr.bf16.mxu0 0
  %1674 = vmatpush2.bf16.msra.mxu0 0
  %1675 = vmatprep.mubr.bf16.mxu0 0
  %1676 = vmatmul.mubr.bf16.gmra.mxu0 %v1563
  %v1677 = vpop.f32.mrf.mxu0
  %v1678 = vadd.f32 %v1613, %v1677
  %v1679 = vpop.f32.mrf.mxu0
  %v1680 = vpop.f32.mrf.mxu0
  %v1681 = vadd.f32 %v1616, %v1680
  %v1682 = vpop.f32.mrf.mxu0
  %1683 = vmatprep.mubr.bf16.mxu0 0
  %1684 = vmatmul.mubr.bf16.gmra.mxu0 %v1566
  %v1685 = vpop.f32.mrf.mxu0
  %v1686 = vadd.f32 %v1621, %v1685
  %v1687 = vpop.f32.mrf.mxu0
  %v1688 = vpop.f32.mrf.mxu0
  %v1689 = vadd.f32 %v1624, %v1688
  %v1690 = vpop.f32.mrf.mxu0
  %1691 = vmatprep.mubr.bf16.mxu0 0
  %1692 = vmatmul.mubr.bf16.gmra.mxu0 %v1569
  %v1693 = vpop.f32.mrf.mxu0
  %v1694 = vadd.f32 %v1629, %v1693
  %v1695 = vpop.f32.mrf.mxu0
  %v1696 = vpop.f32.mrf.mxu0
  %v1697 = vadd.f32 %v1632, %v1696
  %v1698 = vpop.f32.mrf.mxu0
  %1699 = vmatprep.mubr.bf16.mxu0 0
  %1700 = vmatmul.mubr.bf16.gmra.mxu0 %v1572
  %v1701 = vpop.f32.mrf.mxu0
  %v1702 = vadd.f32 %v1637, %v1701
  %v1703 = vpop.f32.mrf.mxu0
  %v1704 = vpop.f32.mrf.mxu0
  %v1705 = vadd.f32 %v1640, %v1704
  %v1706 = vpop.f32.mrf.mxu0
  %1707 = vdwg.mxu0
  %v1708 = vmax.f32 %v1678, 0.0
  %v1709 = vmax.f32 %v1681, 0.0
  %v1710 = vmax.f32 %v1686, 0.0
  %v1711 = vmax.f32 %v1689, 0.0
  %v1712 = vmax.f32 %v1694, 0.0
  %v1713 = vmax.f32 %v1697, 0.0
  %v1714 = vmax.f32 %v1702, 0.0
  %v1715 = vmax.f32 %v1705, 0.0
  %v1716 = vmax.f32 %v1708, %v1709
  %v1717 = vmax.f32 %v1710, %v1711
  %v1718 = vmax.f32 %v1712, %v1713
  %v1719 = vmax.f32 %v1714, %v1715
  %1724 = vrot.lane.b32.xlu0 %v1716, 112
  %v1725 = vpop.permute.xlu0 %1724
  %1726 = vrot.lane.b32.xlu0 %v1717, 112
  %v1727 = vpop.permute.xlu0 %1726
  %1728 = vrot.lane.b32.xlu0 %v1718, 112
  %v1729 = vpop.permute.xlu0 %1728
  %1730 = vrot.lane.b32.xlu0 %v1719, 112
  %v1731 = vpop.permute.xlu0 %1730
  %v1736 = vmax.f32 %v1716, %v1725
  %v1737 = vmax.f32 %v1717, %v1727
  %v1738 = vmax.f32 %v1718, %v1729
  %v1739 = vmax.f32 %v1719, %v1731
  %v1740 = vpack.c.bf16 %v1737, %v1736
  %v1741 = vpack.c.bf16 %v1739, %v1738
  %v1742 = vld [vmem:[%s6] sm:$0xf]
  %v1743 = vld [vmem:[%s6 + $0x4] sm:$0xf]
  %v1744 = vld [vmem:[%s6 + $0x8] sm:$0xf]
  %v1745 = vld [vmem:[%s6 + $0xc] sm:$0xf]
  %v1746 = vld [vmem:[%s6 + $0x10] sm:$0xf]
  %v1747 = vld [vmem:[%s6 + $0x14] sm:$0xf]
  %v1748 = vld [vmem:[%s6 + $0x18] sm:$0xf]
  %v1749 = vld [vmem:[%s6 + $0x1c] sm:$0xf]
  %v1750 = vld [vmem:[%s6 + $0x20] sm:$0xf]
  %v1751 = vld [vmem:[%s6 + $0x24] sm:$0xf]
  %v1752 = vld [vmem:[%s6 + $0x28] sm:$0xf]
  %v1753 = vld [vmem:[%s6 + $0x2c] sm:$0xf]
  %v1754 = vld [vmem:[%s6 + $0x30] sm:$0xf]
  %v1755 = vld [vmem:[%s6 + $0x34] sm:$0xf]
  %v1770 = vunpack.c.l.b16 %v1742
  %v1771 = vunpack.c.l.b16 %v1743
  %v1772 = vunpack.c.l.b16 %v1744
  %v1773 = vunpack.c.l.b16 %v1745
  %v1774 = vunpack.c.l.b16 %v1746
  %v1775 = vunpack.c.l.b16 %v1747
  %v1776 = vunpack.c.l.b16 %v1748
  %v1777 = vunpack.c.l.b16 %v1749
  %v1778 = vunpack.c.l.b16 %v1750
  %v1779 = vunpack.c.l.b16 %v1751
  %v1780 = vunpack.c.l.b16 %v1752
  %v1781 = vunpack.c.l.b16 %v1753
  %v1782 = vunpack.c.l.b16 %v1754
  %v1783 = vunpack.c.l.b16 %v1755
  %v1784 = vpack.c.b16 %v1771, %v1770
  %v1785 = vpack.c.b16 %v1773, %v1772
  %v1786 = vpack.c.b16 %v1775, %v1774
  %v1787 = vpack.c.b16 %v1777, %v1776
  %v1788 = vpack.c.b16 %v1779, %v1778
  %v1789 = vpack.c.b16 %v1781, %v1780
  %v1790 = vpack.c.b16 %v1783, %v1782
  %v1799 = vsel %vm463, %v1740, 0
  %v1802 = vsel %vm463, %v1741, 0
  %1804 = vmatprep.subr.bf16.mxu0 0
  %1805 = vmatpush1.bf16.msra.mxu0 0
  %1806 = vmatprep.subr.bf16.mxu0 0
  %1807 = vmatpush1.bf16.msra.mxu0 %v1790
  %1808 = vmatprep.subr.bf16.mxu0 0
  %1809 = vmatpush1.bf16.msra.mxu0 %v1789
  %1810 = vmatprep.subr.bf16.mxu0 0
  %1811 = vmatpush1.bf16.msra.mxu0 %v1788
  %1812 = vmatprep.subr.bf16.mxu0 0
  %1813 = vmatpush1.bf16.msra.mxu0 %v1787
  %1814 = vmatprep.subr.bf16.mxu0 0
  %1815 = vmatpush1.bf16.msra.mxu0 %v1786
  %1816 = vmatprep.subr.bf16.mxu0 0
  %1817 = vmatpush1.bf16.msra.mxu0 %v1785
  %1818 = vmatprep.subr.bf16.mxu0 0
  %1819 = vmatpush1.bf16.msra.mxu0 %v1784
  %1820 = vmatprep.subr.bf16.mxu0 0
  %1821 = vmatpush2.bf16.msra.mxu0 0
  %1822 = vmatprep.subr.bf16.mxu0 0
  %1823 = vmatpush2.bf16.msra.mxu0 0
  %1824 = vmatprep.subr.bf16.mxu0 0
  %1825 = vmatpush2.bf16.msra.mxu0 0
  %1826 = vmatprep.subr.bf16.mxu0 0
  %1827 = vmatpush2.bf16.msra.mxu0 0
  %1828 = vmatprep.subr.bf16.mxu0 0
  %1829 = vmatpush2.bf16.msra.mxu0 0
  %1830 = vmatprep.subr.bf16.mxu0 0
  %1831 = vmatpush2.bf16.msra.mxu0 0
  %1832 = vmatprep.subr.bf16.mxu0 0
  %1833 = vmatpush2.bf16.msra.mxu0 0
  %1834 = vmatprep.subr.bf16.mxu0 0
  %1835 = vmatpush2.bf16.msra.mxu0 0
  %1836 = vmatprep.mubr.bf16.mxu0 0
  %1837 = vmatmul.mubr.bf16.gmra.mxu0 %v1799
  %v1838 = vpop.f32.mrf.mxu0
  %v1839 = vadd.f32 0.0, %v1838
  %v1840 = vpop.f32.mrf.mxu0
  %v1841 = vpop.f32.mrf.mxu0
  %v1842 = vadd.f32 0.0, %v1841
  %v1843 = vpop.f32.mrf.mxu0
  %1844 = vmatprep.mubr.bf16.mxu0 0
  %1845 = vmatmul.mubr.bf16.gmra.mxu0 %v1802
  %v1846 = vpop.f32.mrf.mxu0
  %v1847 = vadd.f32 0.0, %v1846
  %v1848 = vpop.f32.mrf.mxu0
  %v1849 = vpop.f32.mrf.mxu0
  %v1850 = vadd.f32 0.0, %v1849
  %v1851 = vpop.f32.mrf.mxu0
  %1852 = vdwg.mxu0
  %1854 = vrot.lane.b32.xlu0 %v1842, 64
  %v1855 = vpop.permute.xlu0 %1854
  %1858 = vrot.lane.b32.xlu0 %v1850, 64
  %v1859 = vpop.permute.xlu0 %1858
  %vm1861 = vcmask 523264
  %v1862 = vsel %vm1861, %v1839, %v1855
  %v1863 = vsel %vm1861, %v1847, %v1859
  %v1864 = vpack.c.bf16 %v1862, %v1862
  %v1865 = vpack.c.bf16 %v1863, %v1863
  %v1866 = vld [vmem:[%s7] sm:$0xf]
  %v1867 = vld [vmem:[%s7 + $0x4] sm:$0xf]
  %v1868 = vld [vmem:[%s7 + $0x8] sm:$0xf]
  %v1869 = vld [vmem:[%s7 + $0xc] sm:$0xf]
  %v1870 = vld [vmem:[%s7 + $0x10] sm:$0xf]
  %v1871 = vld [vmem:[%s7 + $0x14] sm:$0xf]
  %v1872 = vld [vmem:[%s7 + $0x18] sm:$0xf]
  %v1873 = vld [vmem:[%s7 + $0x1c] sm:$0xf]
  %v1874 = vld [vmem:[%s7 + $0x20] sm:$0xf]
  %v1875 = vld [vmem:[%s7 + $0x24] sm:$0xf]
  %v1876 = vld [vmem:[%s7 + $0x28] sm:$0xf]
  %v1877 = vld [vmem:[%s7 + $0x2c] sm:$0xf]
  %v1878 = vld [vmem:[%s7 + $0x30] sm:$0xf]
  %v1879 = vld [vmem:[%s7 + $0x34] sm:$0xf]
  %v1880 = vld [vmem:[%s7 + $0x38] sm:$0xf]
  %v1881 = vld [vmem:[%s7 + $0x3c] sm:$0xf]
  %v1882 = vld [vmem:[%s7 + $0x40] sm:$0xf]
  %v1883 = vld [vmem:[%s7 + $0x44] sm:$0xf]
  %v1884 = vld [vmem:[%s7 + $0x48] sm:$0xf]
  %v1885 = vld [vmem:[%s7 + $0x4c] sm:$0xf]
  %v1886 = vld [vmem:[%s7 + $0x50] sm:$0xf]
  %v1887 = vld [vmem:[%s7 + $0x54] sm:$0xf]
  %v1888 = vld [vmem:[%s7 + $0x58] sm:$0xf]
  %v1889 = vld [vmem:[%s7 + $0x5c] sm:$0xf]
  %v1890 = vld [vmem:[%s7 + $0x60] sm:$0xf]
  %v1891 = vld [vmem:[%s7 + $0x64] sm:$0xf]
  %v1892 = vld [vmem:[%s7 + $0x68] sm:$0xf]
  %v1893 = vld [vmem:[%s7 + $0x6c] sm:$0xf]
  %v1894 = vld [vmem:[%s7 + $0x70] sm:$0xf]
  %v1895 = vld [vmem:[%s7 + $0x74] sm:$0xf]
  %v1896 = vld [vmem:[%s7 + $0x78] sm:$0xf]
  %v1897 = vld [vmem:[%s7 + $0x7c] sm:$0xf]
  %v1898 = vld [vmem:[%s8] sm:$0x1]
  %v1900 = vlaneseq
  %v1901 = vshrl.u32 %v1900, 7
  %v1902 = vsub.s32 0, %v1901
  %v1903 = vrot.slane %v1898, %v1902
  %v1937 = vunpack.c.l.b16 %v1866
  %v1938 = vunpack.c.l.b16 %v1867
  %v1939 = vunpack.c.l.b16 %v1868
  %v1940 = vunpack.c.l.b16 %v1869
  %v1941 = vunpack.c.l.b16 %v1870
  %v1942 = vunpack.c.l.b16 %v1871
  %v1943 = vunpack.c.l.b16 %v1872
  %v1944 = vunpack.c.l.b16 %v1873
  %v1945 = vunpack.c.l.b16 %v1874
  %v1946 = vunpack.c.l.b16 %v1875
  %v1947 = vunpack.c.l.b16 %v1876
  %v1948 = vunpack.c.l.b16 %v1877
  %v1949 = vunpack.c.l.b16 %v1878
  %v1950 = vunpack.c.l.b16 %v1879
  %v1951 = vunpack.c.l.b16 %v1880
  %v1952 = vunpack.c.l.b16 %v1881
  %v1953 = vunpack.c.l.b16 %v1882
  %v1954 = vunpack.c.l.b16 %v1883
  %v1955 = vunpack.c.l.b16 %v1884
  %v1956 = vunpack.c.l.b16 %v1885
  %v1957 = vunpack.c.l.b16 %v1886
  %v1958 = vunpack.c.l.b16 %v1887
  %v1959 = vunpack.c.l.b16 %v1888
  %v1960 = vunpack.c.l.b16 %v1889
  %v1961 = vunpack.c.l.b16 %v1890
  %v1962 = vunpack.c.l.b16 %v1891
  %v1963 = vunpack.c.l.b16 %v1892
  %v1964 = vunpack.c.l.b16 %v1893
  %v1965 = vunpack.c.l.b16 %v1894
  %v1966 = vunpack.c.l.b16 %v1895
  %v1967 = vunpack.c.l.b16 %v1896
  %v1968 = vunpack.c.l.b16 %v1897
  %v1969 = vpack.c.b16 %v1938, %v1937
  %v1970 = vpack.c.b16 %v1940, %v1939
  %v1971 = vpack.c.b16 %v1942, %v1941
  %v1972 = vpack.c.b16 %v1944, %v1943
  %v1973 = vpack.c.b16 %v1946, %v1945
  %v1974 = vpack.c.b16 %v1948, %v1947
  %v1975 = vpack.c.b16 %v1950, %v1949
  %v1976 = vpack.c.b16 %v1952, %v1951
  %v1977 = vpack.c.b16 %v1954, %v1953
  %v1978 = vpack.c.b16 %v1956, %v1955
  %v1979 = vpack.c.b16 %v1958, %v1957
  %v1980 = vpack.c.b16 %v1960, %v1959
  %v1981 = vpack.c.b16 %v1962, %v1961
  %v1982 = vpack.c.b16 %v1964, %v1963
  %v1983 = vpack.c.b16 %v1966, %v1965
  %v1984 = vpack.c.b16 %v1968, %v1967
  %2001 = vmatprep.subr.bf16.mxu0 0
  %2002 = vmatpush1.bf16.msra.mxu0 %v1976
  %2003 = vmatprep.subr.bf16.mxu0 0
  %2004 = vmatpush1.bf16.msra.mxu0 %v1975
  %2005 = vmatprep.subr.bf16.mxu0 0
  %2006 = vmatpush1.bf16.msra.mxu0 %v1974
  %2007 = vmatprep.subr.bf16.mxu0 0
  %2008 = vmatpush1.bf16.msra.mxu0 %v1973
  %2009 = vmatprep.subr.bf16.mxu0 0
  %2010 = vmatpush1.bf16.msra.mxu0 %v1972
  %2011 = vmatprep.subr.bf16.mxu0 0
  %2012 = vmatpush1.bf16.msra.mxu0 %v1971
  %2013 = vmatprep.subr.bf16.mxu0 0
  %2014 = vmatpush1.bf16.msra.mxu0 %v1970
  %2015 = vmatprep.subr.bf16.mxu0 0
  %2016 = vmatpush1.bf16.msra.mxu0 %v1969
  %2017 = vmatprep.subr.bf16.mxu0 0
  %2018 = vmatpush2.bf16.msra.mxu0 %v1984
  %2019 = vmatprep.subr.bf16.mxu0 0
  %2020 = vmatpush2.bf16.msra.mxu0 %v1983
  %2021 = vmatprep.subr.bf16.mxu0 0
  %2022 = vmatpush2.bf16.msra.mxu0 %v1982
  %2023 = vmatprep.subr.bf16.mxu0 0
  %2024 = vmatpush2.bf16.msra.mxu0 %v1981
  %2025 = vmatprep.subr.bf16.mxu0 0
  %2026 = vmatpush2.bf16.msra.mxu0 %v1980
  %2027 = vmatprep.subr.bf16.mxu0 0
  %2028 = vmatpush2.bf16.msra.mxu0 %v1979
  %2029 = vmatprep.subr.bf16.mxu0 0
  %2030 = vmatpush2.bf16.msra.mxu0 %v1978
  %2031 = vmatprep.subr.bf16.mxu0 0
  %2032 = vmatpush2.bf16.msra.mxu0 %v1977
  %2033 = vmatprep.mubr.bf16.mxu0 %v1865
  %2034 = vmatmul.mubr.bf16.gmra.mxu0 %v1864
  %v2035 = vpop.f32.mrf.mxu0
  %v2036 = vadd.f32 %v1903, %v2035
  %v2037 = vpop.f32.mrf.mxu0
  %v2038 = vpop.f32.mrf.mxu0
  %v2039 = vpop.f32.mrf.mxu0
  %2040 = vdwg.mxu0
  %v2041 = vmax.f32 %v2036, 0.0
  %v2042 = vpack.c.bf16 %v2041, %v2041
  %v2043 = vld [vmem:[%s9] sm:$0xf]
  %v2044 = vld [vmem:[%s9 + $0x4] sm:$0xf]
  %v2045 = vld [vmem:[%s9 + $0x8] sm:$0xf]
  %v2046 = vld [vmem:[%s9 + $0xc] sm:$0xf]
  %v2047 = vld [vmem:[%s9 + $0x10] sm:$0xf]
  %v2048 = vld [vmem:[%s9 + $0x14] sm:$0xf]
  %v2049 = vld [vmem:[%s9 + $0x18] sm:$0xf]
  %v2050 = vld [vmem:[%s9 + $0x1c] sm:$0xf]
  %v2051 = vld [vmem:[%s9 + $0x20] sm:$0xf]
  %v2052 = vld [vmem:[%s9 + $0x24] sm:$0xf]
  %v2053 = vld [vmem:[%s9 + $0x28] sm:$0xf]
  %v2054 = vld [vmem:[%s9 + $0x2c] sm:$0xf]
  %v2055 = vld [vmem:[%s9 + $0x30] sm:$0xf]
  %v2056 = vld [vmem:[%s9 + $0x34] sm:$0xf]
  %v2057 = vld [vmem:[%s9 + $0x38] sm:$0xf]
  %v2058 = vld [vmem:[%s9 + $0x3c] sm:$0xf]
  %v2059 = vld [vmem:[%s10] sm:$0x1]
  %v2061 = vlaneseq
  %v2062 = vshrl.u32 %v2061, 7
  %v2063 = vsub.s32 0, %v2062
  %v2064 = vrot.slane %v2059, %v2063
  %v2082 = vunpack.c.l.b16 %v2043
  %v2083 = vunpack.c.l.b16 %v2044
  %v2084 = vunpack.c.l.b16 %v2045
  %v2085 = vunpack.c.l.b16 %v2046
  %v2086 = vunpack.c.l.b16 %v2047
  %v2087 = vunpack.c.l.b16 %v2048
  %v2088 = vunpack.c.l.b16 %v2049
  %v2089 = vunpack.c.l.b16 %v2050
  %v2090 = vunpack.c.l.b16 %v2051
  %v2091 = vunpack.c.l.b16 %v2052
  %v2092 = vunpack.c.l.b16 %v2053
  %v2093 = vunpack.c.l.b16 %v2054
  %v2094 = vunpack.c.l.b16 %v2055
  %v2095 = vunpack.c.l.b16 %v2056
  %v2096 = vunpack.c.l.b16 %v2057
  %v2097 = vunpack.c.l.b16 %v2058
  %v2098 = vpack.c.b16 %v2083, %v2082
  %v2099 = vpack.c.b16 %v2085, %v2084
  %v2100 = vpack.c.b16 %v2087, %v2086
  %v2101 = vpack.c.b16 %v2089, %v2088
  %v2102 = vpack.c.b16 %v2091, %v2090
  %v2103 = vpack.c.b16 %v2093, %v2092
  %v2104 = vpack.c.b16 %v2095, %v2094
  %v2105 = vpack.c.b16 %v2097, %v2096
  %2114 = vmatprep.subr.bf16.mxu0 0
  %2115 = vmatpush1.bf16.msra.mxu0 %v2105
  %2116 = vmatprep.subr.bf16.mxu0 0
  %2117 = vmatpush1.bf16.msra.mxu0 %v2104
  %2118 = vmatprep.subr.bf16.mxu0 0
  %2119 = vmatpush1.bf16.msra.mxu0 %v2103
  %2120 = vmatprep.subr.bf16.mxu0 0
  %2121 = vmatpush1.bf16.msra.mxu0 %v2102
  %2122 = vmatprep.subr.bf16.mxu0 0
  %2123 = vmatpush1.bf16.msra.mxu0 %v2101
  %2124 = vmatprep.subr.bf16.mxu0 0
  %2125 = vmatpush1.bf16.msra.mxu0 %v2100
  %2126 = vmatprep.subr.bf16.mxu0 0
  %2127 = vmatpush1.bf16.msra.mxu0 %v2099
  %2128 = vmatprep.subr.bf16.mxu0 0
  %2129 = vmatpush1.bf16.msra.mxu0 %v2098
  %2130 = vmatprep.subr.bf16.mxu0 0
  %2131 = vmatpush2.bf16.msra.mxu0 0
  %2132 = vmatprep.subr.bf16.mxu0 0
  %2133 = vmatpush2.bf16.msra.mxu0 0
  %2134 = vmatprep.subr.bf16.mxu0 0
  %2135 = vmatpush2.bf16.msra.mxu0 0
  %2136 = vmatprep.subr.bf16.mxu0 0
  %2137 = vmatpush2.bf16.msra.mxu0 0
  %2138 = vmatprep.subr.bf16.mxu0 0
  %2139 = vmatpush2.bf16.msra.mxu0 0
  %2140 = vmatprep.subr.bf16.mxu0 0
  %2141 = vmatpush2.bf16.msra.mxu0 0
  %2142 = vmatprep.subr.bf16.mxu0 0
  %2143 = vmatpush2.bf16.msra.mxu0 0
  %2144 = vmatprep.subr.bf16.mxu0 0
  %2145 = vmatpush2.bf16.msra.mxu0 0
  %2146 = vmatprep.mubr.bf16.mxu0 0
  %2147 = vmatmul.mubr.bf16.gmra.mxu0 %v2042
  %v2148 = vpop.f32.mrf.mxu0
  %v2149 = vadd.f32 %v2064, %v2148
  %v2150 = vpop.f32.mrf.mxu0
  %v2151 = vpop.f32.mrf.mxu0
  %v2152 = vpop.f32.mrf.mxu0
  %2153 = vdwg.mxu0
  %v2154 = vmax.f32 %v2149, 0.0
  %v2155 = vpack.c.bf16 %v2154, %v2154
  %v2156 = vld [vmem:[%s11] sm:$0xf]
  %v2157 = vld [vmem:[%s11 + $0x4] sm:$0xf]
  %v2158 = vld [vmem:[%s11 + $0x8] sm:$0xf]
  %v2159 = vld [vmem:[%s11 + $0xc] sm:$0xf]
  %v2160 = vld [vmem:[%s11 + $0x10] sm:$0xf]
  %v2161 = vld [vmem:[%s11 + $0x14] sm:$0xf]
  %v2162 = vld [vmem:[%s11 + $0x18] sm:$0xf]
  %v2163 = vld [vmem:[%s11 + $0x1c] sm:$0xf]
  %v2164 = vld [vmem:[%s11 + $0x20] sm:$0xf]
  %v2165 = vld [vmem:[%s11 + $0x24] sm:$0xf]
  %v2166 = vld [vmem:[%s11 + $0x28] sm:$0xf]
  %v2167 = vld [vmem:[%s11 + $0x2c] sm:$0xf]
  %v2168 = vld [vmem:[%s11 + $0x30] sm:$0xf]
  %v2169 = vld [vmem:[%s11 + $0x34] sm:$0xf]
  %v2170 = vld [vmem:[%s11 + $0x38] sm:$0xf]
  %v2171 = vld [vmem:[%s11 + $0x3c] sm:$0xf]
  %v2172 = vld [vmem:[%s12] sm:$0x1]
  %v2174 = vlaneseq
  %v2175 = vshrl.u32 %v2174, 7
  %v2176 = vsub.s32 0, %v2175
  %v2177 = vrot.slane %v2172, %v2176
  %v2195 = vunpack.c.l.b16 %v2156
  %v2196 = vunpack.c.l.b16 %v2157
  %v2197 = vunpack.c.l.b16 %v2158
  %v2198 = vunpack.c.l.b16 %v2159
  %v2199 = vunpack.c.l.b16 %v2160
  %v2200 = vunpack.c.l.b16 %v2161
  %v2201 = vunpack.c.l.b16 %v2162
  %v2202 = vunpack.c.l.b16 %v2163
  %v2203 = vunpack.c.l.b16 %v2164
  %v2204 = vunpack.c.l.b16 %v2165
  %v2205 = vunpack.c.l.b16 %v2166
  %v2206 = vunpack.c.l.b16 %v2167
  %v2207 = vunpack.c.l.b16 %v2168
  %v2208 = vunpack.c.l.b16 %v2169
  %v2209 = vunpack.c.l.b16 %v2170
  %v2210 = vunpack.c.l.b16 %v2171
  %v2211 = vpack.c.b16 %v2196, %v2195
  %v2212 = vpack.c.b16 %v2198, %v2197
  %v2213 = vpack.c.b16 %v2200, %v2199
  %v2214 = vpack.c.b16 %v2202, %v2201
  %v2215 = vpack.c.b16 %v2204, %v2203
  %v2216 = vpack.c.b16 %v2206, %v2205
  %v2217 = vpack.c.b16 %v2208, %v2207
  %v2218 = vpack.c.b16 %v2210, %v2209
  %2227 = vmatprep.subr.bf16.mxu0 0
  %2228 = vmatpush1.bf16.msra.mxu0 %v2218
  %2229 = vmatprep.subr.bf16.mxu0 0
  %2230 = vmatpush1.bf16.msra.mxu0 %v2217
  %2231 = vmatprep.subr.bf16.mxu0 0
  %2232 = vmatpush1.bf16.msra.mxu0 %v2216
  %2233 = vmatprep.subr.bf16.mxu0 0
  %2234 = vmatpush1.bf16.msra.mxu0 %v2215
  %2235 = vmatprep.subr.bf16.mxu0 0
  %2236 = vmatpush1.bf16.msra.mxu0 %v2214
  %2237 = vmatprep.subr.bf16.mxu0 0
  %2238 = vmatpush1.bf16.msra.mxu0 %v2213
  %2239 = vmatprep.subr.bf16.mxu0 0
  %2240 = vmatpush1.bf16.msra.mxu0 %v2212
  %2241 = vmatprep.subr.bf16.mxu0 0
  %2242 = vmatpush1.bf16.msra.mxu0 %v2211
  %2243 = vmatprep.subr.bf16.mxu0 0
  %2244 = vmatpush2.bf16.msra.mxu0 0
  %2245 = vmatprep.subr.bf16.mxu0 0
  %2246 = vmatpush2.bf16.msra.mxu0 0
  %2247 = vmatprep.subr.bf16.mxu0 0
  %2248 = vmatpush2.bf16.msra.mxu0 0
  %2249 = vmatprep.subr.bf16.mxu0 0
  %2250 = vmatpush2.bf16.msra.mxu0 0
  %2251 = vmatprep.subr.bf16.mxu0 0
  %2252 = vmatpush2.bf16.msra.mxu0 0
  %2253 = vmatprep.subr.bf16.mxu0 0
  %2254 = vmatpush2.bf16.msra.mxu0 0
  %2255 = vmatprep.subr.bf16.mxu0 0
  %2256 = vmatpush2.bf16.msra.mxu0 0
  %2257 = vmatprep.subr.bf16.mxu0 0
  %2258 = vmatpush2.bf16.msra.mxu0 0
  %2259 = vmatprep.mubr.bf16.mxu0 0
  %2260 = vmatmul.mubr.bf16.gmra.mxu0 %v2155
  %v2261 = vpop.f32.mrf.mxu0
  %v2262 = vadd.f32 %v2177, %v2261
  %v2263 = vpop.f32.mrf.mxu0
  %v2264 = vpop.f32.mrf.mxu0
  %v2265 = vpop.f32.mrf.mxu0
  %2266 = vdwg.mxu0
  %2267 = vst [vmem:[%s13] sm:$0xff] %v2262
  // Predicated region
  $region54: #{garment_classifier_forward.1} parent=0 // pred_check
    _
  $region55: #{garment_classifier_forward.1} parent=0 // pred_check_branch
    %2269 = sbr.rel (0) target = $region57
  $region56: #{garment_classifier_forward.1} parent=0 // pred_region
    _
  $region57: #{garment_classifier_forward.1} parent=0 // pred_fallthru
    _
  // Predicated region
  $region58: #{garment_classifier_forward.1} parent=0 // pred_check
    _
  $region59: #{garment_classifier_forward.1} parent=0 // pred_check_branch
    %2271 = sbr.rel (0) target = $region61
  $region60: #{garment_classifier_forward.1} parent=0 // pred_region
    _
  $region61: #{garment_classifier_forward.1} parent=0 // pred_fallthru
    _

</llo_original>
